<compile_context>
chip_gen: v7x
topology: tpu7x:2x2x1
jax: 0.10.0
libtpu: 0.0.40
codegen_flags: <defaults>
</compile_context>

<pallas_src>
import functools
import numpy as np
import jax
import jax.numpy as jnp
from jax.experimental import pallas as pl
from jax.experimental.pallas import tpu as pltpu


# ------------------------------------------------------------------
# Graph setup (mirrors Graph._compute_adjency_matrix; host-side setup glue)
# ------------------------------------------------------------------
def _compute_distance_matrix(edges, num_nodes, directed=False):
    A = np.zeros((num_nodes, num_nodes), dtype=np.float64)
    for i, j in edges:
        A[i, j] = 1.0
        if not directed:
            A[j, i] = 1.0
    for i in range(num_nodes):
        A[i, i] = 1.0
    dist = np.full((num_nodes, num_nodes), np.inf)
    np.fill_diagonal(dist, 0.0)
    B = np.eye(num_nodes)
    step = 0
    while np.max(dist) == np.inf:
        C = A @ B
        mask = (np.minimum(C, 1.0) - np.minimum(B, 1.0)).astype(bool)
        dist[mask] = step + 1
        B = C
        step += 1
    return dist


def _mean_pooling_normalize(A):
    counts = A.sum(axis=0)
    D = np.zeros((A.shape[1], A.shape[1]))
    for i in range(A.shape[1]):
        if counts[i] > 0:
            D[i, i] = 1.0 / counts[i]
    return A @ D


def build_adjacency(edges, num_nodes, max_dist=1):
    """normalise_first=True, mean_pooling norm, 'distance' partition strategy."""
    dist = _compute_distance_matrix(edges, num_nodes)
    adj = np.zeros_like(dist)
    for d in range(0, max_dist + 1):
        adj[dist == d] = 1.0
    adj = _mean_pooling_normalize(adj)
    parts = [np.where(dist == d, adj, 0.0) for d in range(0, max_dist + 1)]
    return np.stack(parts, axis=0).astype(np.float32)  # (P, N, N)


# ------------------------------------------------------------------
# Pallas kernel: one grid step handles TB batch samples
# ------------------------------------------------------------------
def _graph_kernel(x_ref, w_ref, ab_ref, ei_ref, out_ref, *, TB, P, Ep, T, V, inv_scale):
    C1 = x_ref.shape[-1]          # in_channels + 1 (ones channel for the bias fold)
    PE = P * Ep                   # phi column span; theta columns start at PE

    # Fused 1x1 conv (phi + theta, all partitions) with bias folded into the matmul.
    xb = x_ref[...].reshape(TB * T * V, C1)                    # leading-dim merge (row = (b,t,v))
    proj = jnp.dot(xb, w_ref[...], preferred_element_type=jnp.float32)   # (TB*T*V, 2*PE)

    # Bring the embedding axis next to frames so the score matmul gets K = T*Ep.
    proj3 = proj.reshape(TB * T, V, 2 * PE)                    # leading-dim split (row = (b,t))
    projT = jnp.transpose(proj3, (0, 2, 1))                    # (TB*T, 2*PE, V) minor-2 swap

    cols = []
    for b in range(TB):                                        # static, small
        slab = projT[b * T:(b + 1) * T]                        # (T, 2*PE, V)
        for p in range(P):                                     # static, small
            phiB = slab[:, p * Ep:(p + 1) * Ep, :].reshape(T * Ep, V)         # (T*Ep, V)
            thB = slab[:, PE + p * Ep:PE + (p + 1) * Ep, :].reshape(T * Ep, V)
            phiA = phiB.T                                      # (V, T*Ep), 2D transpose
            # Single MXU matmul with K = T*Ep; bf16 inputs, f32 accumulation.
            s = jnp.dot(phiA.astype(jnp.bfloat16), thB.astype(jnp.bfloat16),
                        preferred_element_type=jnp.float32)    # (V, V)
            cols.append(s)

    s_packed = jnp.concatenate(cols, axis=1) * inv_scale       # (V, TB*P*V) lane-packed scores

    # Softmax over rows (dim=-2), applied ONCE on the packed slab (columns independent).
    # TODO(synk): mask padded rows before max/exp/sum if V is ever not a multiple of 8.
    m = jnp.max(s_packed, axis=0, keepdims=True)
    e = jnp.exp(s_packed - m)
    soft = e * pl.reciprocal(jnp.sum(e, axis=0, keepdims=True), approx=True)

    out_ref[0] = ((ab_ref[...] + soft) * ei_ref[...]).astype(out_ref.dtype)


def graph_forward_pallas(x, A, B_adj, edge_importance, w_phi, b_phi, w_theta, b_theta,
                         *, num_grid_steps=None):
    """x: (batch, in_channels, frames, nodes); returns (batch, P, nodes, nodes) float32."""
    batch, C, T, V = x.shape
    P, E = w_phi.shape[0], w_phi.shape[1]
    Ep = ((E + 7) // 8) * 8      # pad embedding dim to a sublane multiple (zero columns)

    # Split the batch over the grid: 2 steps keeps both v7x TensorCores busy; each step
    # processes TB samples so per-step overhead is amortised on v5e/v6e as well.
    if num_grid_steps is None:
        num_grid_steps = 2 if (batch % 2 == 0 and batch >= 2) else 1
    assert batch % num_grid_steps == 0
    TB = batch // num_grid_steps

    # x -> channel-last rows (t, v), plus a ones channel to fold the conv biases into the matmul.
    # TODO(synk): at production sizes feed x channel-last from the producing layer instead.
    xk = jnp.transpose(x, (0, 2, 3, 1)).reshape(batch, T * V, C).astype(jnp.float32)
    xk = jnp.concatenate([xk, jnp.ones((batch, T * V, 1), jnp.float32)], axis=-1)  # (B, T*V, C+1)

    def pack_w(w, b):  # (P, E, C), (P, E) -> (C+1, P*Ep) with zero-padded embedding columns
        wp = jnp.zeros((P, Ep, C), jnp.float32).at[:, :E, :].set(w.astype(jnp.float32))
        bp = jnp.zeros((P, Ep), jnp.float32).at[:, :E].set(b.astype(jnp.float32))
        wcat = jnp.transpose(wp, (2, 0, 1)).reshape(C, P * Ep)
        return jnp.concatenate([wcat, bp.reshape(1, P * Ep)], axis=0)

    # Fused phi|theta weights: (C+1, 2*P*Ep)
    w_aug = jnp.concatenate([pack_w(w_phi, b_phi), pack_w(w_theta, b_theta)], axis=1)

    # A + B and edge_importance packed lane-dense and tiled across the TB local samples.
    ab = jnp.transpose((A + B_adj).astype(jnp.float32), (1, 0, 2)).reshape(V, P * V)
    ei = jnp.transpose(edge_importance.astype(jnp.float32), (1, 0, 2)).reshape(V, P * V)
    ab_packed = jnp.tile(ab, (1, TB))                          # (V, TB*P*V)
    ei_packed = jnp.tile(ei, (1, TB))

    kernel = functools.partial(_graph_kernel, TB=TB, P=P, Ep=Ep, T=T, V=V,
                               inv_scale=1.0 / float(E * T))

    packed = pl.pallas_call(
        kernel,
        out_shape=jax.ShapeDtypeStruct((num_grid_steps, V, TB * P * V), jnp.float32),
        grid_spec=pltpu.PrefetchScalarGridSpec(
            num_scalar_prefetch=0,
            grid=(num_grid_steps,),
            in_specs=[
                pl.BlockSpec((TB, T * V, C + 1), lambda s: (s, 0, 0)),    # x (TB samples)
                pl.BlockSpec((C + 1, 2 * P * Ep), lambda s: (0, 0)),      # fused phi|theta weights
                pl.BlockSpec((V, TB * P * V), lambda s: (0, 0)),          # A + B (packed, tiled)
                pl.BlockSpec((V, TB * P * V), lambda s: (0, 0)),          # edge_importance
            ],
            out_specs=pl.BlockSpec((1, V, TB * P * V), lambda s: (s, 0, 0)),
        ),
        compiler_params=pltpu.CompilerParams(
            dimension_semantics=("parallel",)),
    )(xk, w_aug, ab_packed, ei_packed)

    # (steps, V, TB*P*V) -> (steps, V, TB, P, V) -> (batch, P, V, V)
    out = packed.reshape(num_grid_steps, V, TB, P, V)
    return jnp.transpose(out, (0, 2, 3, 1, 4)).reshape(batch, P, V, V)


# ------------------------------------------------------------------
# Pure-JAX reference (mirrors the PyTorch forward exactly)
# ------------------------------------------------------------------
def graph_forward_ref(x, A, B_adj, edge_importance, w_phi, b_phi, w_theta, b_theta):
    batch, C, T, V = x.shape
    P, E = w_phi.shape[0], w_phi.shape[1]
    Abase = A + B_adj
    comps = []
    for i in range(P):
        phi = jnp.einsum('ec,bctv->betv', w_phi[i], x) + b_phi[i][None, :, None, None]
        th = jnp.einsum('ec,bctv->betv', w_theta[i], x) + b_theta[i][None, :, None, None]
        C1 = jnp.transpose(phi, (0, 3, 1, 2)).reshape(batch, V, E * T)
        C2 = th.reshape(batch, E * T, V)
        S = jnp.matmul(C1, C2) / (E * T)
        comps.append(jax.nn.softmax(S, axis=-2))
    Cmat = jnp.stack(comps, axis=1)  # (B, P, V, V)
    return (Abase[None] + Cmat) * edge_importance[None]


if __name__ == "__main__":
    batch, in_channels, frames, nodes = 4, 4, 8, 8
    emb = 4  # embedding_dimension

    # Chain graph on 8 nodes; 'distance' partition with max_neighbour_distance=1 -> P=2
    edges = [(0, 1), (1, 2), (2, 3), (3, 4), (4, 5), (5, 6), (6, 7)]
    A_np = build_adjacency(edges, nodes, max_dist=1)
    P = A_np.shape[0]

    A = jnp.asarray(A_np)
    B_adj = jnp.zeros_like(A)              # learnable component, init zeros (as in __init__)
    edge_importance = jnp.ones_like(A)     # edge importance, init ones (as in __init__)

    key = jax.random.PRNGKey(0)
    k1, k2, k3, k4, k5 = jax.random.split(key, 5)
    x = jax.random.normal(k1, (batch, in_channels, frames, nodes), dtype=jnp.float32)
    w_phi = 0.1 * jax.random.normal(k2, (P, emb, in_channels), dtype=jnp.float32)
    b_phi = 0.1 * jax.random.normal(k3, (P, emb), dtype=jnp.float32)
    w_theta = 0.1 * jax.random.normal(k4, (P, emb, in_channels), dtype=jnp.float32)
    b_theta = 0.1 * jax.random.normal(k5, (P, emb), dtype=jnp.float32)

    out = graph_forward_pallas(x, A, B_adj, edge_importance, w_phi, b_phi, w_theta, b_theta)
    out = jax.block_until_ready(out)

    ref = graph_forward_ref(x, A, B_adj, edge_importance, w_phi, b_phi, w_theta, b_theta)
    np.testing.assert_allclose(np.asarray(out), np.asarray(ref), rtol=2e-3, atol=2e-3)
    print("KERNEL_OK")
</pallas_src>

<mosaic_0001>
module attributes {stable_mosaic.version = 11 : i64} {
  func.func @_graph_kernel(%arg0: i32, %arg1: memref<2x64x5xf32, #tpu.memory_space<vmem>>, %arg2: memref<5x32xf32, #tpu.memory_space<vmem>>, %arg3: memref<8x32xf32, #tpu.memory_space<vmem>>, %arg4: memref<8x32xf32, #tpu.memory_space<vmem>>, %arg5: memref<1x8x32xf32, #tpu.memory_space<vmem>>) attributes {dimension_semantics = [#tpu.dimension_semantics<parallel>], iteration_bounds = array<i64: 2>, scalar_prefetch = 0 : i64, scratch_operands = 0 : i64, tpu.core_type = #tpu.core_type<tc>, window_params = [{transform_indices = @transform_0, window_bounds = array<i64: 2, 64, 5>}, {pipeline_mode = #tpu.pipeline_mode<synchronous>, transform_indices = @transform_1, window_bounds = array<i64: 5, 32>}, {pipeline_mode = #tpu.pipeline_mode<synchronous>, transform_indices = @transform_2, window_bounds = array<i64: 8, 32>}, {pipeline_mode = #tpu.pipeline_mode<synchronous>, transform_indices = @transform_3, window_bounds = array<i64: 8, 32>}, {transform_indices = @transform_4, window_bounds = array<i64: 1, 8, 32>}]} {
    %c0 = arith.constant 0 : index
    %c0_0 = arith.constant 0 : index
    %c0_1 = arith.constant 0 : index
    %0 = vector.load %arg1[%c0, %c0_0, %c0_1] : memref<2x64x5xf32, #tpu.memory_space<vmem>>, vector<2x64x5xf32>
    %1 = vector.shape_cast %0 : vector<2x64x5xf32> to vector<128x5xf32>
    %c0_2 = arith.constant 0 : index
    %c0_3 = arith.constant 0 : index
    %2 = vector.load %arg2[%c0_2, %c0_3] : memref<5x32xf32, #tpu.memory_space<vmem>>, vector<5x32xf32>
    %cst = arith.constant dense<0.000000e+00> : vector<128x32xf32>
    %3 = tpu.matmul %1, %2, %cst {dimension_numbers = #tpu.dot_dimension_numbers<[1], [0], [0], [1], [0, 0, 1, 1], [], []>} : vector<128x5xf32>, vector<5x32xf32>, vector<128x32xf32> -> vector<128x32xf32>
    %4 = vector.shape_cast %3 : vector<128x32xf32> to vector<16x8x32xf32>
    %5 = tpu.transpose %4, [0, 2, 1] : vector<16x8x32xf32> -> vector<16x32x8xf32>
    %6 = vector.extract_strided_slice %5 {offsets = [0, 0, 0], sizes = [8, 32, 8], strides = [1, 1, 1]} : vector<16x32x8xf32> to vector<8x32x8xf32>
    %7 = vector.extract_strided_slice %6 {offsets = [0, 0, 0], sizes = [8, 8, 8], strides = [1, 1, 1]} : vector<8x32x8xf32> to vector<8x8x8xf32>
    %8 = vector.shape_cast %7 : vector<8x8x8xf32> to vector<64x8xf32>
    %9 = vector.extract_strided_slice %6 {offsets = [0, 16, 0], sizes = [8, 8, 8], strides = [1, 1, 1]} : vector<8x32x8xf32> to vector<8x8x8xf32>
    %10 = vector.shape_cast %9 : vector<8x8x8xf32> to vector<64x8xf32>
    %11 = tpu.transpose %8, [1, 0] : vector<64x8xf32> -> vector<8x64xf32>
    %12 = arith.truncf %11 : vector<8x64xf32> to vector<8x64xbf16>
    %13 = arith.truncf %10 : vector<64x8xf32> to vector<64x8xbf16>
    %cst_4 = arith.constant dense<0.000000e+00> : vector<8x8xf32>
    %14 = tpu.matmul %12, %13, %cst_4 {dimension_numbers = #tpu.dot_dimension_numbers<[1], [0], [0], [1], [0, 0, 1, 1], [], []>} : vector<8x64xbf16>, vector<64x8xbf16>, vector<8x8xf32> -> vector<8x8xf32>
    %15 = vector.extract_strided_slice %6 {offsets = [0, 8, 0], sizes = [8, 8, 8], strides = [1, 1, 1]} : vector<8x32x8xf32> to vector<8x8x8xf32>
    %16 = vector.shape_cast %15 : vector<8x8x8xf32> to vector<64x8xf32>
    %17 = vector.extract_strided_slice %6 {offsets = [0, 24, 0], sizes = [8, 8, 8], strides = [1, 1, 1]} : vector<8x32x8xf32> to vector<8x8x8xf32>
    %18 = vector.shape_cast %17 : vector<8x8x8xf32> to vector<64x8xf32>
    %19 = tpu.transpose %16, [1, 0] : vector<64x8xf32> -> vector<8x64xf32>
    %20 = arith.truncf %19 : vector<8x64xf32> to vector<8x64xbf16>
    %21 = arith.truncf %18 : vector<64x8xf32> to vector<64x8xbf16>
    %cst_5 = arith.constant dense<0.000000e+00> : vector<8x8xf32>
    %22 = tpu.matmul %20, %21, %cst_5 {dimension_numbers = #tpu.dot_dimension_numbers<[1], [0], [0], [1], [0, 0, 1, 1], [], []>} : vector<8x64xbf16>, vector<64x8xbf16>, vector<8x8xf32> -> vector<8x8xf32>
    %23 = vector.extract_strided_slice %5 {offsets = [8, 0, 0], sizes = [8, 32, 8], strides = [1, 1, 1]} : vector<16x32x8xf32> to vector<8x32x8xf32>
    %24 = vector.extract_strided_slice %23 {offsets = [0, 0, 0], sizes = [8, 8, 8], strides = [1, 1, 1]} : vector<8x32x8xf32> to vector<8x8x8xf32>
    %25 = vector.shape_cast %24 : vector<8x8x8xf32> to vector<64x8xf32>
    %26 = vector.extract_strided_slice %23 {offsets = [0, 16, 0], sizes = [8, 8, 8], strides = [1, 1, 1]} : vector<8x32x8xf32> to vector<8x8x8xf32>
    %27 = vector.shape_cast %26 : vector<8x8x8xf32> to vector<64x8xf32>
    %28 = tpu.transpose %25, [1, 0] : vector<64x8xf32> -> vector<8x64xf32>
    %29 = arith.truncf %28 : vector<8x64xf32> to vector<8x64xbf16>
    %30 = arith.truncf %27 : vector<64x8xf32> to vector<64x8xbf16>
    %cst_6 = arith.constant dense<0.000000e+00> : vector<8x8xf32>
    %31 = tpu.matmul %29, %30, %cst_6 {dimension_numbers = #tpu.dot_dimension_numbers<[1], [0], [0], [1], [0, 0, 1, 1], [], []>} : vector<8x64xbf16>, vector<64x8xbf16>, vector<8x8xf32> -> vector<8x8xf32>
    %32 = vector.extract_strided_slice %23 {offsets = [0, 8, 0], sizes = [8, 8, 8], strides = [1, 1, 1]} : vector<8x32x8xf32> to vector<8x8x8xf32>
    %33 = vector.shape_cast %32 : vector<8x8x8xf32> to vector<64x8xf32>
    %34 = vector.extract_strided_slice %23 {offsets = [0, 24, 0], sizes = [8, 8, 8], strides = [1, 1, 1]} : vector<8x32x8xf32> to vector<8x8x8xf32>
    %35 = vector.shape_cast %34 : vector<8x8x8xf32> to vector<64x8xf32>
    %36 = tpu.transpose %33, [1, 0] : vector<64x8xf32> -> vector<8x64xf32>
    %37 = arith.truncf %36 : vector<8x64xf32> to vector<8x64xbf16>
    %38 = arith.truncf %35 : vector<64x8xf32> to vector<64x8xbf16>
    %cst_7 = arith.constant dense<0.000000e+00> : vector<8x8xf32>
    %39 = tpu.matmul %37, %38, %cst_7 {dimension_numbers = #tpu.dot_dimension_numbers<[1], [0], [0], [1], [0, 0, 1, 1], [], []>} : vector<8x64xbf16>, vector<64x8xbf16>, vector<8x8xf32> -> vector<8x8xf32>
    %40 = tpu.concatenate %14, %22, %31, %39 in 1 : vector<8x8xf32>, vector<8x8xf32>, vector<8x8xf32>, vector<8x8xf32> -> vector<8x32xf32>
    %cst_8 = arith.constant 3.125000e-02 : f32
    %41 = vector.broadcast %cst_8 : f32 to vector<8x32xf32>
    %42 = arith.mulf %40, %41 : vector<8x32xf32>
    %cst_9 = arith.constant dense<0xFF800000> : vector<32xf32>
    %43 = vector.multi_reduction <maximumf>, %42, %cst_9 [0] : vector<8x32xf32> to vector<32xf32>
    %44 = vector.shape_cast %43 : vector<32xf32> to vector<1x32xf32>
    %45 = vector.broadcast %44 : vector<1x32xf32> to vector<8x32xf32>
    %46 = arith.subf %42, %45 : vector<8x32xf32>
    %47 = math.exp %46 : vector<8x32xf32>
    %cst_10 = arith.constant dense<0.000000e+00> : vector<32xf32>
    %48 = vector.multi_reduction <add>, %47, %cst_10 [0] : vector<8x32xf32> to vector<32xf32>
    %49 = vector.shape_cast %48 : vector<32xf32> to vector<1x32xf32>
    %50 = tpu.reciprocal %49 {approx = true} : vector<1x32xf32> -> vector<1x32xf32>
    %51 = vector.broadcast %50 : vector<1x32xf32> to vector<8x32xf32>
    %52 = arith.mulf %47, %51 : vector<8x32xf32>
    %c0_11 = arith.constant 0 : index
    %c0_12 = arith.constant 0 : index
    %53 = vector.load %arg3[%c0_11, %c0_12] : memref<8x32xf32, #tpu.memory_space<vmem>>, vector<8x32xf32>
    %54 = arith.addf %53, %52 : vector<8x32xf32>
    %c0_13 = arith.constant 0 : index
    %c0_14 = arith.constant 0 : index
    %55 = vector.load %arg4[%c0_13, %c0_14] : memref<8x32xf32, #tpu.memory_space<vmem>>, vector<8x32xf32>
    %56 = arith.mulf %54, %55 : vector<8x32xf32>
    %c0_15 = arith.constant 0 : index
    %c0_16 = arith.constant 0 : index
    %c0_17 = arith.constant 0 : index
    %57 = vector.load %arg5[%c0_15, %c0_16, %c0_17] : memref<1x8x32xf32, #tpu.memory_space<vmem>>, vector<1x8x32xf32>
    %58 = vector.shape_cast %57 : vector<1x8x32xf32> to vector<8x32xf32>
    %59 = vector.shape_cast %56 : vector<8x32xf32> to vector<1x8x32xf32>
    tpu.vector_store %arg5[%c0_15, %c0_16, %c0_17], %59 {strides = array<i32>} : memref<1x8x32xf32, #tpu.memory_space<vmem>>, vector<1x8x32xf32>,
    return
  }
  func.func @transform_0(%arg0: i32) -> (i32, i32, i32) {
    %c0_i32 = arith.constant 0 : i32
    %c0_i32_0 = arith.constant 0 : i32
    %c0_i32_1 = arith.constant 0 : i32
    return %arg0, %c0_i32, %c0_i32_0 : i32, i32, i32
  }
  func.func @transform_1(%arg0: i32) -> (i32, i32) {
    %c0_i32 = arith.constant 0 : i32
    %c0_i32_0 = arith.constant 0 : i32
    %c0_i32_1 = arith.constant 0 : i32
    return %c0_i32, %c0_i32_0 : i32, i32
  }
  func.func @transform_2(%arg0: i32) -> (i32, i32) {
    %c0_i32 = arith.constant 0 : i32
    %c0_i32_0 = arith.constant 0 : i32
    %c0_i32_1 = arith.constant 0 : i32
    return %c0_i32, %c0_i32_0 : i32, i32
  }
  func.func @transform_3(%arg0: i32) -> (i32, i32) {
    %c0_i32 = arith.constant 0 : i32
    %c0_i32_0 = arith.constant 0 : i32
    %c0_i32_1 = arith.constant 0 : i32
    return %c0_i32, %c0_i32_0 : i32, i32
  }
  func.func @transform_4(%arg0: i32) -> (i32, i32, i32) {
    %c0_i32 = arith.constant 0 : i32
    %c0_i32_0 = arith.constant 0 : i32
    %c0_i32_1 = arith.constant 0 : i32
    return %arg0, %c0_i32, %c0_i32_0 : i32, i32, i32
  }
}

</mosaic_0001>

<llo_original>
// kernel: tpu_custom_call.1
$region0: #{tpu_custom_call.1}
  #allocation0 [shape = 'u32[]', space=smem, size = 0x4, offset = 0x4, fixed_abs, tag = 'smem constant byte address 0x4 - core index']
  #allocation1 [shape = 'u32[144,128]{1,0:T(1,128)}', space=vmem, size = 0x12000, scoped, tag = 'internal scratch']
  %s0 = inlined_call_operand.vmem [shape: f32[4,64,5], index: 0, kind: input, shape index: {}]
  %s1 = inlined_call_operand.vmem [shape: f32[5,32], index: 1, kind: input, shape index: {}]
  %s2 = inlined_call_operand.vmem [shape: f32[8,32], index: 2, kind: input, shape index: {}]
  %s3 = inlined_call_operand.vmem [shape: f32[8,32], index: 3, kind: input, shape index: {}]
  %s4 = inlined_call_operand.hbm [shape: f32[2,8,32], index: 4, kind: output, shape index: {}]
  %s5 = sld [smem:[#allocation0]]
  $region49: #{tpu_custom_call.1} parent=0
    _
  %s7 = ssub.s32 1, %s5
  %s8 = scalar_select 0, %s7, %s5
  $region1: #{tpu_custom_call.1} parent=0
    #allocation2 [shape = 'u8[8192]{0}', space=vmem, size = 0x2000, scoped, tag = 'output window, operand 0']
    #allocation3 [shape = 's32[2]{0}', space=sflag, size = 0x8, scoped, tag = 'scoped memory for tpu_custom_call.1']
    %9 = vsyncpa [#allocation3], 0
    %s10 = scalar_lea.sflag [#allocation3], 1
    %11 = vsyncpa %s10, 0
    loop: start=0, step=1, limit=4
    $region2: #{tpu_custom_call.1} parent=1 // loop_pre_header
      _
    $region3: #{tpu_custom_call.1} parent=1 // loop_header
      %s13 = sphi 0, %s17
      %p14 = scmp.ge.s32.totalorder %s13, 4
      %s23 = sphi 0, %s25
      %s26 = sphi 0, %s23
      %s27 = sphi 0, %s26
      %s43 = sphi 0, %s27
      %s47 = sphi 0, %s47
      %s49 = sphi 0, %s47
      %s50 = sphi 0, %s49
      %s64 = sphi 0, %s50
      %s68 = sphi 0, %s68
      %s70 = sphi 0, %s68
      %s71 = sphi 0, %s70
      %s85 = sphi 0, %s71
      %s89 = sphi 0, %s89
      %s91 = sphi 0, %s89
      %s92 = sphi 0, %s91
      %s106 = sphi 0, %s92
      %s112 = sphi 0, %s114
      %s115 = sphi 0, %s112
      %s116 = sphi 0, %s115
      %s132 = sphi 0, %s116
    $region4: #{tpu_custom_call.1} parent=1 // loop_header_branch
      %16 = sbr.rel (%p14) target = $region8
    $region5: #{tpu_custom_call.1} parent=1 // loop_body
      %s18 = ssub.s32 %s13, 1
      %s19 = ssub.s32 %s13, 2
      %s20 = sadd.s32 %s13, 1
      %s21 = ssub.s32 %s13, %s20
      %p22 = scmp.eq.s32.totalorder %s21, 0
      %s24 = sadd.s32 %s23, 1
      %s25 = scalar_select %p22, %s23, %s24
      %p28 = pneg %p22
      %p29 = scmp.eq.s32.totalorder %s13, 1
      %p30 = por %p28, %p29
      %p31 = scmp.ne.s32.totalorder %s23, %s26
      %p32 = scmp.eq.s32.totalorder %s13, 0
      %p33 = por %p31, %p32
      %p34 = scmp.ne.s32.totalorder %s23, %s26
      %p35 = scmp.eq.s32.totalorder %s18, 1
      %p36 = por %p34, %p35
      %p37 = scmp.ne.s32.totalorder %s26, %s27
      %p38 = scmp.eq.s32.totalorder %s18, 0
      %p39 = por %p37, %p38
      %p40 = scmp.ne.s32.totalorder %s26, %s27
      %p41 = scmp.eq.s32.totalorder %s19, 1
      %p42 = por %p40, %p41
      %p44 = scmp.ne.s32.totalorder %s27, %s43
      %p45 = scmp.eq.s32.totalorder %s19, 0
      %p46 = por %p44, %p45
      %s48 = sadd.s32 %s47, 1
      %p51 = scmp.eq.s32.totalorder %s13, 1
      %p52 = scmp.ne.s32.totalorder %s47, %s49
      %p53 = scmp.eq.s32.totalorder %s13, 0
      %p54 = por %p52, %p53
      %p55 = scmp.ne.s32.totalorder %s47, %s49
      %p56 = scmp.eq.s32.totalorder %s18, 1
      %p57 = por %p55, %p56
      %p58 = scmp.ne.s32.totalorder %s49, %s50
      %p59 = scmp.eq.s32.totalorder %s18, 0
      %p60 = por %p58, %p59
      %p61 = scmp.ne.s32.totalorder %s49, %s50
      %p62 = scmp.eq.s32.totalorder %s19, 1
      %p63 = por %p61, %p62
      %p65 = scmp.ne.s32.totalorder %s50, %s64
      %p66 = scmp.eq.s32.totalorder %s19, 0
      %p67 = por %p65, %p66
      %s69 = sadd.s32 %s68, 1
      %p72 = scmp.eq.s32.totalorder %s13, 1
      %p73 = scmp.ne.s32.totalorder %s68, %s70
      %p74 = scmp.eq.s32.totalorder %s13, 0
      %p75 = por %p73, %p74
      %p76 = scmp.ne.s32.totalorder %s68, %s70
      %p77 = scmp.eq.s32.totalorder %s18, 1
      %p78 = por %p76, %p77
      %p79 = scmp.ne.s32.totalorder %s70, %s71
      %p80 = scmp.eq.s32.totalorder %s18, 0
      %p81 = por %p79, %p80
      %p82 = scmp.ne.s32.totalorder %s70, %s71
      %p83 = scmp.eq.s32.totalorder %s19, 1
      %p84 = por %p82, %p83
      %p86 = scmp.ne.s32.totalorder %s71, %s85
      %p87 = scmp.eq.s32.totalorder %s19, 0
      %p88 = por %p86, %p87
      %s90 = sadd.s32 %s89, 1
      %p93 = scmp.eq.s32.totalorder %s13, 1
      %p94 = scmp.ne.s32.totalorder %s89, %s91
      %p95 = scmp.eq.s32.totalorder %s13, 0
      %p96 = por %p94, %p95
      %p97 = scmp.ne.s32.totalorder %s89, %s91
      %p98 = scmp.eq.s32.totalorder %s18, 1
      %p99 = por %p97, %p98
      %p100 = scmp.ne.s32.totalorder %s91, %s92
      %p101 = scmp.eq.s32.totalorder %s18, 0
      %p102 = por %p100, %p101
      %p103 = scmp.ne.s32.totalorder %s91, %s92
      %p104 = scmp.eq.s32.totalorder %s19, 1
      %p105 = por %p103, %p104
      %p107 = scmp.ne.s32.totalorder %s92, %s106
      %p108 = scmp.eq.s32.totalorder %s19, 0
      %p109 = por %p107, %p108
      %s110 = ssub.s32 %s13, %s20
      %p111 = scmp.eq.s32.totalorder %s110, 0
      %s113 = sadd.s32 %s112, 1
      %s114 = scalar_select %p111, %s112, %s113
      %p117 = pneg %p111
      %p118 = scmp.eq.s32.totalorder %s13, 1
      %p119 = por %p117, %p118
      %p120 = scmp.ne.s32.totalorder %s112, %s115
      %p121 = scmp.eq.s32.totalorder %s13, 0
      %p122 = por %p120, %p121
      %p123 = scmp.ne.s32.totalorder %s112, %s115
      %p124 = scmp.eq.s32.totalorder %s18, 1
      %p125 = por %p123, %p124
      %p126 = scmp.ne.s32.totalorder %s115, %s116
      %p127 = scmp.eq.s32.totalorder %s18, 0
      %p128 = por %p126, %p127
      %p129 = scmp.ne.s32.totalorder %s115, %s116
      %p130 = scmp.eq.s32.totalorder %s19, 1
      %p131 = por %p129, %p130
      %p133 = scmp.ne.s32.totalorder %s116, %s132
      %p134 = scmp.eq.s32.totalorder %s19, 0
      %p135 = por %p133, %p134
      %p136 = scmp.le.s32.totalorder 1, %s13
      %p137 = scmp.lt.s32.totalorder %s13, 3
      %p138 = pnand %p136, %p137
      %p139 = pneg %p138
      // Predicated region
      $region9: #{tpu_custom_call.1} parent=5 // pred_check
        _
      $region10: #{tpu_custom_call.1} parent=5 // pred_check_branch
        %141 = sbr.rel (%p138) target = $region12
      $region11: #{tpu_custom_call.1} parent=5 // pred_region
        %s142 = ssub.s32 %s13, 1
        // Predicated region
        $region13: #{tpu_custom_call.1} parent=11 // pred_check
          %p143 = pneg %p60
        $region14: #{tpu_custom_call.1} parent=11 // pred_check_branch
          %145 = sbr.rel (%p143) target = $region16
        $region15: #{tpu_custom_call.1} parent=11 // pred_region
          _
        $region16: #{tpu_custom_call.1} parent=11 // pred_fallthru
          _
        // Predicated region
        $region17: #{tpu_custom_call.1} parent=11 // pred_check
          %p146 = pneg %p81
        $region18: #{tpu_custom_call.1} parent=11 // pred_check_branch
          %148 = sbr.rel (%p146) target = $region20
        $region19: #{tpu_custom_call.1} parent=11 // pred_region
          _
        $region20: #{tpu_custom_call.1} parent=11 // pred_fallthru
          _
        // Predicated region
        $region21: #{tpu_custom_call.1} parent=11 // pred_check
          %p149 = pneg %p102
        $region22: #{tpu_custom_call.1} parent=11 // pred_check_branch
          %151 = sbr.rel (%p149) target = $region24
        $region23: #{tpu_custom_call.1} parent=11 // pred_region
          _
        $region24: #{tpu_custom_call.1} parent=11 // pred_fallthru
          _
      $region12: #{tpu_custom_call.1} parent=5 // pred_fallthru
        _
      %p152 = scmp.lt.s32.totalorder %s13, 2
      // Predicated region
      $region25: #{tpu_custom_call.1} parent=5 // pred_check
        %p153 = pneg %p152
      $region26: #{tpu_custom_call.1} parent=5 // pred_check_branch
        %155 = sbr.rel (%p153) target = $region28
      $region27: #{tpu_custom_call.1} parent=5 // pred_region
        // Predicated region
        $region29: #{tpu_custom_call.1} parent=27 // pred_check
          %p156 = pneg %p33
        $region30: #{tpu_custom_call.1} parent=27 // pred_check_branch
          %158 = sbr.rel (%p156) target = $region32
        $region31: #{tpu_custom_call.1} parent=27 // pred_region
          %s159 = smul.u32 2, %s13
          %p160 = scmp.lt.s32.totalorder %s159, 3
          %s161 = scalar_select %p160, %s159, 3
          %s162 = smul.addr %s161, 8
          %s163 = smul.addr %s162, 8
          %s164 = scalar_lea.vmem %s0, %s163
          %s165 = smul.u32 2, %s13
        $region32: #{tpu_custom_call.1} parent=27 // pred_fallthru
          _
      $region28: #{tpu_custom_call.1} parent=5 // pred_fallthru
        _
      %p166 = scmp.le.s32.totalorder 1, %s13
      %p167 = scmp.lt.s32.totalorder %s13, 3
      %p168 = pnand %p166, %p167
      %p169 = pneg %p168
      // Predicated region
      $region33: #{tpu_custom_call.1} parent=5 // pred_check
        _
      $region34: #{tpu_custom_call.1} parent=5 // pred_check_branch
        %171 = sbr.rel (%p168) target = $region36
      $region35: #{tpu_custom_call.1} parent=5 // pred_region
        %s172 = ssub.s32 %s13, 1
        %s173 = smul.u32 2, %s18
        %p174 = scmp.lt.s32.totalorder %s173, 3
        %s175 = scalar_select %p174, %s173, 3
        %s176 = smul.addr %s175, 8
        %s177 = smul.addr %s176, 8
        %s178 = scalar_lea.vmem %s0, %s177
        %p179 = pneg %p39
        %p180 = pneg %p36
        %p181 = pneg %p60
        %p182 = pneg %p57
        %p183 = pneg %p81
        %p184 = pneg %p78
        %p185 = pneg %p102
        %p186 = pneg %p99
        %p187 = pneg %p128
        %p188 = pneg %p125
        %s189 = sand.u32 %s115, 1
        %s190 = scalar_lea.sflag [#allocation3], %s189
        %s191 = sand.u32 %s115, 1
        %s192 = smul.addr %s191, 8
        %s193 = scalar_lea.vmem [#allocation2], %s192
        %s194 = smul.u32 2, %s18
        %p195 = scmp.lt.s32.totalorder %s194, 3
        %s196 = scalar_select %p195, %s194, 3
        %s197 = smul.addr %s196, 8
        %s198 = smul.addr %s197, 8
        %s199 = scalar_lea.vmem %s0, %s198
        %s200 = smul.u32 2, %s18
        %v202 = vld [vmem:[%s199] sm:$0xff]
        %v203 = vld [vmem:[%s199 + $0x8] sm:$0xff]
        %v204 = vld [vmem:[%s199 + $0x10] sm:$0xff]
        %v205 = vld [vmem:[%s199 + $0x18] sm:$0xff]
        %v206 = vld [vmem:[%s199 + $0x20] sm:$0xff]
        %v207 = vld [vmem:[%s199 + $0x28] sm:$0xff]
        %v208 = vld [vmem:[%s199 + $0x30] sm:$0xff]
        %v209 = vld [vmem:[%s199 + $0x38] sm:$0xff]
        %v210 = vld [vmem:[%s199 + $0x40] sm:$0xff]
        %v211 = vld [vmem:[%s199 + $0x48] sm:$0xff]
        %v212 = vld [vmem:[%s199 + $0x50] sm:$0xff]
        %v213 = vld [vmem:[%s199 + $0x58] sm:$0xff]
        %v214 = vld [vmem:[%s199 + $0x60] sm:$0xff]
        %v215 = vld [vmem:[%s199 + $0x68] sm:$0xff]
        %v216 = vld [vmem:[%s199 + $0x70] sm:$0xff]
        %v217 = vld [vmem:[%s199 + $0x78] sm:$0xff]
        %v218 = vld [vmem:[%s1] sm:$0x1f]
        %vm219 = vcmask 39936
        %v221 = vsel %vm219, %v202, 0
        %v224 = vsel %vm219, %v203, 0
        %v227 = vsel %vm219, %v204, 0
        %v230 = vsel %vm219, %v205, 0
        %v233 = vsel %vm219, %v206, 0
        %v236 = vsel %vm219, %v207, 0
        %v239 = vsel %vm219, %v208, 0
        %v242 = vsel %vm219, %v209, 0
        %v245 = vsel %vm219, %v210, 0
        %v248 = vsel %vm219, %v211, 0
        %v251 = vsel %vm219, %v212, 0
        %v254 = vsel %vm219, %v213, 0
        %v257 = vsel %vm219, %v214, 0
        %v260 = vsel %vm219, %v215, 0
        %v263 = vsel %vm219, %v216, 0
        %v266 = vsel %vm219, %v217, 0
        %vm268 = vcmask 1044480
        %v270 = vsel %vm268, %v218, 0
        %272 = vmatprep.subr.mxu0 0.0
        %273 = vmatpush1.msra.mxu0 %v270
        %274 = vmatprep.subr.mxu0 0.0
        %275 = vmatpush1.msra.mxu0 0.0
        %276 = vmatprep.subr.mxu0 0.0
        %277 = vmatpush1.msra.mxu0 0.0
        %278 = vmatprep.subr.mxu0 0.0
        %279 = vmatpush1.msra.mxu0 0.0
        %280 = vmatprep.subr.mxu0 0.0
        %281 = vmatpush1.msra.mxu0 0.0
        %282 = vmatprep.subr.mxu0 0.0
        %283 = vmatpush1.msra.mxu0 0.0
        %284 = vmatprep.subr.mxu0 0.0
        %285 = vmatpush1.msra.mxu0 0.0
        %286 = vmatprep.subr.mxu0 0.0
        %287 = vmatpush1.msra.mxu0 0.0
        %288 = vmatprep.subr.mxu0 0.0
        %289 = vmatpush1.msra.mxu0 0.0
        %290 = vmatprep.subr.mxu0 0.0
        %291 = vmatpush1.msra.mxu0 0.0
        %292 = vmatprep.subr.mxu0 0.0
        %293 = vmatpush1.msra.mxu0 0.0
        %294 = vmatprep.subr.mxu0 0.0
        %295 = vmatpush1.msra.mxu0 0.0
        %296 = vmatprep.subr.mxu0 0.0
        %297 = vmatpush1.msra.mxu0 0.0
        %298 = vmatprep.subr.mxu0 0.0
        %299 = vmatpush1.msra.mxu0 0.0
        %300 = vmatprep.subr.mxu0 0.0
        %301 = vmatpush1.msra.mxu0 0.0
        %302 = vmatprep.subr.mxu0 0.0
        %303 = vmatpush1.msra.mxu0 0.0
        %304 = vmatprep.subr.mxu0 0.0
        %305 = vmatpush1.msra.mxu0 0.0
        %306 = vmatprep.subr.mxu0 0.0
        %307 = vmatpush1.msra.mxu0 0.0
        %308 = vmatprep.subr.mxu0 0.0
        %309 = vmatpush1.msra.mxu0 0.0
        %310 = vmatprep.subr.mxu0 0.0
        %311 = vmatpush1.msra.mxu0 0.0
        %312 = vmatprep.subr.mxu0 0.0
        %313 = vmatpush1.msra.mxu0 0.0
        %314 = vmatprep.subr.mxu0 0.0
        %315 = vmatpush1.msra.mxu0 0.0
        %316 = vmatprep.subr.mxu0 0.0
        %317 = vmatpush1.msra.mxu0 0.0
        %318 = vmatprep.subr.mxu0 0.0
        %319 = vmatpush1.msra.mxu0 0.0
        %320 = vmatprep.subr.mxu0 0.0
        %321 = vmatpush1.msra.mxu0 0.0
        %322 = vmatprep.subr.mxu0 0.0
        %323 = vmatpush1.msra.mxu0 0.0
        %324 = vmatprep.subr.mxu0 0.0
        %325 = vmatpush1.msra.mxu0 0.0
        %326 = vmatprep.subr.mxu0 0.0
        %327 = vmatpush1.msra.mxu0 0.0
        %328 = vmatprep.subr.mxu0 0.0
        %329 = vmatpush1.msra.mxu0 0.0
        %330 = vmatprep.subr.mxu0 0.0
        %331 = vmatpush1.msra.mxu0 0.0
        %332 = vmatprep.subr.mxu0 0.0
        %333 = vmatpush1.msra.mxu0 0.0
        %334 = vmatprep.subr.mxu0 0.0
        %335 = vmatpush1.msra.mxu0 0.0
        %336 = vmatprep.mubr.f32.mxu0 0.0
        %337 = vmatmul.mubr.f32.gmra.mrb[0].mxu0 %v221
        %v338 = vpop.f32.mrb[0].mxu0
        %v339 = vadd.f32 0.0, %v338
        %v340 = vpop.f32.mrb[0].mxu0
        %341 = vmatprep.mubr.f32.mxu0 0.0
        %342 = vmatmul.mubr.f32.gmra.mrb[0].mxu0 %v224
        %v343 = vpop.f32.mrb[0].mxu0
        %v344 = vadd.f32 0.0, %v343
        %v345 = vpop.f32.mrb[0].mxu0
        %346 = vmatprep.mubr.f32.mxu0 0.0
        %347 = vmatmul.mubr.f32.gmra.mrb[0].mxu0 %v227
        %v348 = vpop.f32.mrb[0].mxu0
        %v349 = vadd.f32 0.0, %v348
        %v350 = vpop.f32.mrb[0].mxu0
        %351 = vmatprep.mubr.f32.mxu0 0.0
        %352 = vmatmul.mubr.f32.gmra.mrb[0].mxu0 %v230
        %v353 = vpop.f32.mrb[0].mxu0
        %v354 = vadd.f32 0.0, %v353
        %v355 = vpop.f32.mrb[0].mxu0
        %356 = vmatprep.mubr.f32.mxu0 0.0
        %357 = vmatmul.mubr.f32.gmra.mrb[0].mxu0 %v233
        %v358 = vpop.f32.mrb[0].mxu0
        %v359 = vadd.f32 0.0, %v358
        %v360 = vpop.f32.mrb[0].mxu0
        %361 = vmatprep.mubr.f32.mxu0 0.0
        %362 = vmatmul.mubr.f32.gmra.mrb[0].mxu0 %v236
        %v363 = vpop.f32.mrb[0].mxu0
        %v364 = vadd.f32 0.0, %v363
        %v365 = vpop.f32.mrb[0].mxu0
        %366 = vmatprep.mubr.f32.mxu0 0.0
        %367 = vmatmul.mubr.f32.gmra.mrb[0].mxu0 %v239
        %v368 = vpop.f32.mrb[0].mxu0
        %v369 = vadd.f32 0.0, %v368
        %v370 = vpop.f32.mrb[0].mxu0
        %371 = vmatprep.mubr.f32.mxu0 0.0
        %372 = vmatmul.mubr.f32.gmra.mrb[0].mxu0 %v242
        %v373 = vpop.f32.mrb[0].mxu0
        %v374 = vadd.f32 0.0, %v373
        %v375 = vpop.f32.mrb[0].mxu0
        %376 = vmatprep.mubr.f32.mxu0 0.0
        %377 = vmatmul.mubr.f32.gmra.mrb[0].mxu0 %v245
        %v378 = vpop.f32.mrb[0].mxu0
        %v379 = vadd.f32 0.0, %v378
        %v380 = vpop.f32.mrb[0].mxu0
        %381 = vmatprep.mubr.f32.mxu0 0.0
        %382 = vmatmul.mubr.f32.gmra.mrb[0].mxu0 %v248
        %v383 = vpop.f32.mrb[0].mxu0
        %v384 = vadd.f32 0.0, %v383
        %v385 = vpop.f32.mrb[0].mxu0
        %386 = vmatprep.mubr.f32.mxu0 0.0
        %387 = vmatmul.mubr.f32.gmra.mrb[0].mxu0 %v251
        %v388 = vpop.f32.mrb[0].mxu0
        %v389 = vadd.f32 0.0, %v388
        %v390 = vpop.f32.mrb[0].mxu0
        %391 = vmatprep.mubr.f32.mxu0 0.0
        %392 = vmatmul.mubr.f32.gmra.mrb[0].mxu0 %v254
        %v393 = vpop.f32.mrb[0].mxu0
        %v394 = vadd.f32 0.0, %v393
        %v395 = vpop.f32.mrb[0].mxu0
        %396 = vmatprep.mubr.f32.mxu0 0.0
        %397 = vmatmul.mubr.f32.gmra.mrb[0].mxu0 %v257
        %v398 = vpop.f32.mrb[0].mxu0
        %v399 = vadd.f32 0.0, %v398
        %v400 = vpop.f32.mrb[0].mxu0
        %401 = vmatprep.mubr.f32.mxu0 0.0
        %402 = vmatmul.mubr.f32.gmra.mrb[0].mxu0 %v260
        %v403 = vpop.f32.mrb[0].mxu0
        %v404 = vadd.f32 0.0, %v403
        %v405 = vpop.f32.mrb[0].mxu0
        %406 = vmatprep.mubr.f32.mxu0 0.0
        %407 = vmatmul.mubr.f32.gmra.mrb[0].mxu0 %v263
        %v408 = vpop.f32.mrb[0].mxu0
        %v409 = vadd.f32 0.0, %v408
        %v410 = vpop.f32.mrb[0].mxu0
        %411 = vmatprep.mubr.f32.mxu0 0.0
        %412 = vmatmul.mubr.f32.gmra.mrb[0].mxu0 %v266
        %v413 = vpop.f32.mrb[0].mxu0
        %v414 = vadd.f32 0.0, %v413
        %v415 = vpop.f32.mrb[0].mxu0
        %416 = vdwg.mxu0
        %417 = vxpose.xlu0.b32.start [1/16] %v339, 128
        %418 = vxpose.xlu0.b32.cont [2/16] 0.0, 128
        %419 = vxpose.xlu0.b32.cont [3/16] 0.0, 128
        %420 = vxpose.xlu0.b32.cont [4/16] 0.0, 128
        %421 = vxpose.xlu0.b32.cont [5/16] 0.0, 128
        %422 = vxpose.xlu0.b32.cont [6/16] 0.0, 128
        %423 = vxpose.xlu0.b32.cont [7/16] 0.0, 128
        %424 = vxpose.xlu0.b32.cont [8/16] 0.0, 128
        %425 = vxpose.xlu0.b32.cont [9/16] 0.0, 128
        %426 = vxpose.xlu0.b32.cont [10/16] 0.0, 128
        %427 = vxpose.xlu0.b32.cont [11/16] 0.0, 128
        %428 = vxpose.xlu0.b32.cont [12/16] 0.0, 128
        %429 = vxpose.xlu0.b32.cont [13/16] 0.0, 128
        %430 = vxpose.xlu0.b32.cont [14/16] 0.0, 128
        %431 = vxpose.xlu0.b32.cont [15/16] 0.0, 128
        %432 = vxpose.xlu0.b32.end [16/16] 0.0, 128
        %v433 = vpop.trf.xlu0
        %v434 = vpop.trf.xlu0
        %v435 = vpop.trf.xlu0
        %v436 = vpop.trf.xlu0
        %v437 = vpop.trf.xlu0
        %v438 = vpop.trf.xlu0
        %v439 = vpop.trf.xlu0
        %v440 = vpop.trf.xlu0
        %v441 = vpop.trf.xlu0
        %v442 = vpop.trf.xlu0
        %v443 = vpop.trf.xlu0
        %v444 = vpop.trf.xlu0
        %v445 = vpop.trf.xlu0
        %v446 = vpop.trf.xlu0
        %v447 = vpop.trf.xlu0
        %v448 = vpop.trf.xlu0
        %449 = vxpose.xlu0.b32.start [1/16] %v344, 128
        %450 = vxpose.xlu0.b32.cont [2/16] 0.0, 128
        %451 = vxpose.xlu0.b32.cont [3/16] 0.0, 128
        %452 = vxpose.xlu0.b32.cont [4/16] 0.0, 128
        %453 = vxpose.xlu0.b32.cont [5/16] 0.0, 128
        %454 = vxpose.xlu0.b32.cont [6/16] 0.0, 128
        %455 = vxpose.xlu0.b32.cont [7/16] 0.0, 128
        %456 = vxpose.xlu0.b32.cont [8/16] 0.0, 128
        %457 = vxpose.xlu0.b32.cont [9/16] 0.0, 128
        %458 = vxpose.xlu0.b32.cont [10/16] 0.0, 128
        %459 = vxpose.xlu0.b32.cont [11/16] 0.0, 128
        %460 = vxpose.xlu0.b32.cont [12/16] 0.0, 128
        %461 = vxpose.xlu0.b32.cont [13/16] 0.0, 128
        %462 = vxpose.xlu0.b32.cont [14/16] 0.0, 128
        %463 = vxpose.xlu0.b32.cont [15/16] 0.0, 128
        %464 = vxpose.xlu0.b32.end [16/16] 0.0, 128
        %v465 = vpop.trf.xlu0
        %v466 = vpop.trf.xlu0
        %v467 = vpop.trf.xlu0
        %v468 = vpop.trf.xlu0
        %v469 = vpop.trf.xlu0
        %v470 = vpop.trf.xlu0
        %v471 = vpop.trf.xlu0
        %v472 = vpop.trf.xlu0
        %v473 = vpop.trf.xlu0
        %v474 = vpop.trf.xlu0
        %v475 = vpop.trf.xlu0
        %v476 = vpop.trf.xlu0
        %v477 = vpop.trf.xlu0
        %v478 = vpop.trf.xlu0
        %v479 = vpop.trf.xlu0
        %v480 = vpop.trf.xlu0
        %481 = vxpose.xlu0.b32.start [1/16] %v349, 128
        %482 = vxpose.xlu0.b32.cont [2/16] 0.0, 128
        %483 = vxpose.xlu0.b32.cont [3/16] 0.0, 128
        %484 = vxpose.xlu0.b32.cont [4/16] 0.0, 128
        %485 = vxpose.xlu0.b32.cont [5/16] 0.0, 128
        %486 = vxpose.xlu0.b32.cont [6/16] 0.0, 128
        %487 = vxpose.xlu0.b32.cont [7/16] 0.0, 128
        %488 = vxpose.xlu0.b32.cont [8/16] 0.0, 128
        %489 = vxpose.xlu0.b32.cont [9/16] 0.0, 128
        %490 = vxpose.xlu0.b32.cont [10/16] 0.0, 128
        %491 = vxpose.xlu0.b32.cont [11/16] 0.0, 128
        %492 = vxpose.xlu0.b32.cont [12/16] 0.0, 128
        %493 = vxpose.xlu0.b32.cont [13/16] 0.0, 128
        %494 = vxpose.xlu0.b32.cont [14/16] 0.0, 128
        %495 = vxpose.xlu0.b32.cont [15/16] 0.0, 128
        %496 = vxpose.xlu0.b32.end [16/16] 0.0, 128
        %v497 = vpop.trf.xlu0
        %v498 = vpop.trf.xlu0
        %v499 = vpop.trf.xlu0
        %v500 = vpop.trf.xlu0
        %v501 = vpop.trf.xlu0
        %v502 = vpop.trf.xlu0
        %v503 = vpop.trf.xlu0
        %v504 = vpop.trf.xlu0
        %v505 = vpop.trf.xlu0
        %v506 = vpop.trf.xlu0
        %v507 = vpop.trf.xlu0
        %v508 = vpop.trf.xlu0
        %v509 = vpop.trf.xlu0
        %v510 = vpop.trf.xlu0
        %v511 = vpop.trf.xlu0
        %v512 = vpop.trf.xlu0
        %513 = vxpose.xlu0.b32.start [1/16] %v354, 128
        %514 = vxpose.xlu0.b32.cont [2/16] 0.0, 128
        %515 = vxpose.xlu0.b32.cont [3/16] 0.0, 128
        %516 = vxpose.xlu0.b32.cont [4/16] 0.0, 128
        %517 = vxpose.xlu0.b32.cont [5/16] 0.0, 128
        %518 = vxpose.xlu0.b32.cont [6/16] 0.0, 128
        %519 = vxpose.xlu0.b32.cont [7/16] 0.0, 128
        %520 = vxpose.xlu0.b32.cont [8/16] 0.0, 128
        %521 = vxpose.xlu0.b32.cont [9/16] 0.0, 128
        %522 = vxpose.xlu0.b32.cont [10/16] 0.0, 128
        %523 = vxpose.xlu0.b32.cont [11/16] 0.0, 128
        %524 = vxpose.xlu0.b32.cont [12/16] 0.0, 128
        %525 = vxpose.xlu0.b32.cont [13/16] 0.0, 128
        %526 = vxpose.xlu0.b32.cont [14/16] 0.0, 128
        %527 = vxpose.xlu0.b32.cont [15/16] 0.0, 128
        %528 = vxpose.xlu0.b32.end [16/16] 0.0, 128
        %v529 = vpop.trf.xlu0
        %v530 = vpop.trf.xlu0
        %v531 = vpop.trf.xlu0
        %v532 = vpop.trf.xlu0
        %v533 = vpop.trf.xlu0
        %v534 = vpop.trf.xlu0
        %v535 = vpop.trf.xlu0
        %v536 = vpop.trf.xlu0
        %v537 = vpop.trf.xlu0
        %v538 = vpop.trf.xlu0
        %v539 = vpop.trf.xlu0
        %v540 = vpop.trf.xlu0
        %v541 = vpop.trf.xlu0
        %v542 = vpop.trf.xlu0
        %v543 = vpop.trf.xlu0
        %v544 = vpop.trf.xlu0
        %545 = vxpose.xlu0.b32.start [1/16] %v359, 128
        %546 = vxpose.xlu0.b32.cont [2/16] 0.0, 128
        %547 = vxpose.xlu0.b32.cont [3/16] 0.0, 128
        %548 = vxpose.xlu0.b32.cont [4/16] 0.0, 128
        %549 = vxpose.xlu0.b32.cont [5/16] 0.0, 128
        %550 = vxpose.xlu0.b32.cont [6/16] 0.0, 128
        %551 = vxpose.xlu0.b32.cont [7/16] 0.0, 128
        %552 = vxpose.xlu0.b32.cont [8/16] 0.0, 128
        %553 = vxpose.xlu0.b32.cont [9/16] 0.0, 128
        %554 = vxpose.xlu0.b32.cont [10/16] 0.0, 128
        %555 = vxpose.xlu0.b32.cont [11/16] 0.0, 128
        %556 = vxpose.xlu0.b32.cont [12/16] 0.0, 128
        %557 = vxpose.xlu0.b32.cont [13/16] 0.0, 128
        %558 = vxpose.xlu0.b32.cont [14/16] 0.0, 128
        %559 = vxpose.xlu0.b32.cont [15/16] 0.0, 128
        %560 = vxpose.xlu0.b32.end [16/16] 0.0, 128
        %v561 = vpop.trf.xlu0
        %v562 = vpop.trf.xlu0
        %v563 = vpop.trf.xlu0
        %v564 = vpop.trf.xlu0
        %v565 = vpop.trf.xlu0
        %v566 = vpop.trf.xlu0
        %v567 = vpop.trf.xlu0
        %v568 = vpop.trf.xlu0
        %v569 = vpop.trf.xlu0
        %v570 = vpop.trf.xlu0
        %v571 = vpop.trf.xlu0
        %v572 = vpop.trf.xlu0
        %v573 = vpop.trf.xlu0
        %v574 = vpop.trf.xlu0
        %v575 = vpop.trf.xlu0
        %v576 = vpop.trf.xlu0
        %577 = vxpose.xlu0.b32.start [1/16] %v364, 128
        %578 = vxpose.xlu0.b32.cont [2/16] 0.0, 128
        %579 = vxpose.xlu0.b32.cont [3/16] 0.0, 128
        %580 = vxpose.xlu0.b32.cont [4/16] 0.0, 128
        %581 = vxpose.xlu0.b32.cont [5/16] 0.0, 128
        %582 = vxpose.xlu0.b32.cont [6/16] 0.0, 128
        %583 = vxpose.xlu0.b32.cont [7/16] 0.0, 128
        %584 = vxpose.xlu0.b32.cont [8/16] 0.0, 128
        %585 = vxpose.xlu0.b32.cont [9/16] 0.0, 128
        %586 = vxpose.xlu0.b32.cont [10/16] 0.0, 128
        %587 = vxpose.xlu0.b32.cont [11/16] 0.0, 128
        %588 = vxpose.xlu0.b32.cont [12/16] 0.0, 128
        %589 = vxpose.xlu0.b32.cont [13/16] 0.0, 128
        %590 = vxpose.xlu0.b32.cont [14/16] 0.0, 128
        %591 = vxpose.xlu0.b32.cont [15/16] 0.0, 128
        %592 = vxpose.xlu0.b32.end [16/16] 0.0, 128
        %v593 = vpop.trf.xlu0
        %v594 = vpop.trf.xlu0
        %v595 = vpop.trf.xlu0
        %v596 = vpop.trf.xlu0
        %v597 = vpop.trf.xlu0
        %v598 = vpop.trf.xlu0
        %v599 = vpop.trf.xlu0
        %v600 = vpop.trf.xlu0
        %v601 = vpop.trf.xlu0
        %v602 = vpop.trf.xlu0
        %v603 = vpop.trf.xlu0
        %v604 = vpop.trf.xlu0
        %v605 = vpop.trf.xlu0
        %v606 = vpop.trf.xlu0
        %v607 = vpop.trf.xlu0
        %v608 = vpop.trf.xlu0
        %609 = vxpose.xlu0.b32.start [1/16] %v369, 128
        %610 = vxpose.xlu0.b32.cont [2/16] 0.0, 128
        %611 = vxpose.xlu0.b32.cont [3/16] 0.0, 128
        %612 = vxpose.xlu0.b32.cont [4/16] 0.0, 128
        %613 = vxpose.xlu0.b32.cont [5/16] 0.0, 128
        %614 = vxpose.xlu0.b32.cont [6/16] 0.0, 128
        %615 = vxpose.xlu0.b32.cont [7/16] 0.0, 128
        %616 = vxpose.xlu0.b32.cont [8/16] 0.0, 128
        %617 = vxpose.xlu0.b32.cont [9/16] 0.0, 128
        %618 = vxpose.xlu0.b32.cont [10/16] 0.0, 128
        %619 = vxpose.xlu0.b32.cont [11/16] 0.0, 128
        %620 = vxpose.xlu0.b32.cont [12/16] 0.0, 128
        %621 = vxpose.xlu0.b32.cont [13/16] 0.0, 128
        %622 = vxpose.xlu0.b32.cont [14/16] 0.0, 128
        %623 = vxpose.xlu0.b32.cont [15/16] 0.0, 128
        %624 = vxpose.xlu0.b32.end [16/16] 0.0, 128
        %v625 = vpop.trf.xlu0
        %v626 = vpop.trf.xlu0
        %v627 = vpop.trf.xlu0
        %v628 = vpop.trf.xlu0
        %v629 = vpop.trf.xlu0
        %v630 = vpop.trf.xlu0
        %v631 = vpop.trf.xlu0
        %v632 = vpop.trf.xlu0
        %v633 = vpop.trf.xlu0
        %v634 = vpop.trf.xlu0
        %v635 = vpop.trf.xlu0
        %v636 = vpop.trf.xlu0
        %v637 = vpop.trf.xlu0
        %v638 = vpop.trf.xlu0
        %v639 = vpop.trf.xlu0
        %v640 = vpop.trf.xlu0
        %641 = vxpose.xlu0.b32.start [1/16] %v374, 128
        %642 = vxpose.xlu0.b32.cont [2/16] 0.0, 128
        %643 = vxpose.xlu0.b32.cont [3/16] 0.0, 128
        %644 = vxpose.xlu0.b32.cont [4/16] 0.0, 128
        %645 = vxpose.xlu0.b32.cont [5/16] 0.0, 128
        %646 = vxpose.xlu0.b32.cont [6/16] 0.0, 128
        %647 = vxpose.xlu0.b32.cont [7/16] 0.0, 128
        %648 = vxpose.xlu0.b32.cont [8/16] 0.0, 128
        %649 = vxpose.xlu0.b32.cont [9/16] 0.0, 128
        %650 = vxpose.xlu0.b32.cont [10/16] 0.0, 128
        %651 = vxpose.xlu0.b32.cont [11/16] 0.0, 128
        %652 = vxpose.xlu0.b32.cont [12/16] 0.0, 128
        %653 = vxpose.xlu0.b32.cont [13/16] 0.0, 128
        %654 = vxpose.xlu0.b32.cont [14/16] 0.0, 128
        %655 = vxpose.xlu0.b32.cont [15/16] 0.0, 128
        %656 = vxpose.xlu0.b32.end [16/16] 0.0, 128
        %v657 = vpop.trf.xlu0
        %v658 = vpop.trf.xlu0
        %v659 = vpop.trf.xlu0
        %v660 = vpop.trf.xlu0
        %v661 = vpop.trf.xlu0
        %v662 = vpop.trf.xlu0
        %v663 = vpop.trf.xlu0
        %v664 = vpop.trf.xlu0
        %v665 = vpop.trf.xlu0
        %v666 = vpop.trf.xlu0
        %v667 = vpop.trf.xlu0
        %v668 = vpop.trf.xlu0
        %v669 = vpop.trf.xlu0
        %v670 = vpop.trf.xlu0
        %v671 = vpop.trf.xlu0
        %v672 = vpop.trf.xlu0
        %673 = vxpose.xlu0.b32.start [1/16] %v379, 128
        %674 = vxpose.xlu0.b32.cont [2/16] 0.0, 128
        %675 = vxpose.xlu0.b32.cont [3/16] 0.0, 128
        %676 = vxpose.xlu0.b32.cont [4/16] 0.0, 128
        %677 = vxpose.xlu0.b32.cont [5/16] 0.0, 128
        %678 = vxpose.xlu0.b32.cont [6/16] 0.0, 128
        %679 = vxpose.xlu0.b32.cont [7/16] 0.0, 128
        %680 = vxpose.xlu0.b32.cont [8/16] 0.0, 128
        %681 = vxpose.xlu0.b32.cont [9/16] 0.0, 128
        %682 = vxpose.xlu0.b32.cont [10/16] 0.0, 128
        %683 = vxpose.xlu0.b32.cont [11/16] 0.0, 128
        %684 = vxpose.xlu0.b32.cont [12/16] 0.0, 128
        %685 = vxpose.xlu0.b32.cont [13/16] 0.0, 128
        %686 = vxpose.xlu0.b32.cont [14/16] 0.0, 128
        %687 = vxpose.xlu0.b32.cont [15/16] 0.0, 128
        %688 = vxpose.xlu0.b32.end [16/16] 0.0, 128
        %v689 = vpop.trf.xlu0
        %v690 = vpop.trf.xlu0
        %v691 = vpop.trf.xlu0
        %v692 = vpop.trf.xlu0
        %v693 = vpop.trf.xlu0
        %v694 = vpop.trf.xlu0
        %v695 = vpop.trf.xlu0
        %v696 = vpop.trf.xlu0
        %v697 = vpop.trf.xlu0
        %v698 = vpop.trf.xlu0
        %v699 = vpop.trf.xlu0
        %v700 = vpop.trf.xlu0
        %v701 = vpop.trf.xlu0
        %v702 = vpop.trf.xlu0
        %v703 = vpop.trf.xlu0
        %v704 = vpop.trf.xlu0
        %705 = vxpose.xlu0.b32.start [1/16] %v384, 128
        %706 = vxpose.xlu0.b32.cont [2/16] 0.0, 128
        %707 = vxpose.xlu0.b32.cont [3/16] 0.0, 128
        %708 = vxpose.xlu0.b32.cont [4/16] 0.0, 128
        %709 = vxpose.xlu0.b32.cont [5/16] 0.0, 128
        %710 = vxpose.xlu0.b32.cont [6/16] 0.0, 128
        %711 = vxpose.xlu0.b32.cont [7/16] 0.0, 128
        %712 = vxpose.xlu0.b32.cont [8/16] 0.0, 128
        %713 = vxpose.xlu0.b32.cont [9/16] 0.0, 128
        %714 = vxpose.xlu0.b32.cont [10/16] 0.0, 128
        %715 = vxpose.xlu0.b32.cont [11/16] 0.0, 128
        %716 = vxpose.xlu0.b32.cont [12/16] 0.0, 128
        %717 = vxpose.xlu0.b32.cont [13/16] 0.0, 128
        %718 = vxpose.xlu0.b32.cont [14/16] 0.0, 128
        %719 = vxpose.xlu0.b32.cont [15/16] 0.0, 128
        %720 = vxpose.xlu0.b32.end [16/16] 0.0, 128
        %v721 = vpop.trf.xlu0
        %v722 = vpop.trf.xlu0
        %v723 = vpop.trf.xlu0
        %v724 = vpop.trf.xlu0
        %v725 = vpop.trf.xlu0
        %v726 = vpop.trf.xlu0
        %v727 = vpop.trf.xlu0
        %v728 = vpop.trf.xlu0
        %v729 = vpop.trf.xlu0
        %v730 = vpop.trf.xlu0
        %v731 = vpop.trf.xlu0
        %v732 = vpop.trf.xlu0
        %v733 = vpop.trf.xlu0
        %v734 = vpop.trf.xlu0
        %v735 = vpop.trf.xlu0
        %v736 = vpop.trf.xlu0
        %737 = vxpose.xlu0.b32.start [1/16] %v389, 128
        %738 = vxpose.xlu0.b32.cont [2/16] 0.0, 128
        %739 = vxpose.xlu0.b32.cont [3/16] 0.0, 128
        %740 = vxpose.xlu0.b32.cont [4/16] 0.0, 128
        %741 = vxpose.xlu0.b32.cont [5/16] 0.0, 128
        %742 = vxpose.xlu0.b32.cont [6/16] 0.0, 128
        %743 = vxpose.xlu0.b32.cont [7/16] 0.0, 128
        %744 = vxpose.xlu0.b32.cont [8/16] 0.0, 128
        %745 = vxpose.xlu0.b32.cont [9/16] 0.0, 128
        %746 = vxpose.xlu0.b32.cont [10/16] 0.0, 128
        %747 = vxpose.xlu0.b32.cont [11/16] 0.0, 128
        %748 = vxpose.xlu0.b32.cont [12/16] 0.0, 128
        %749 = vxpose.xlu0.b32.cont [13/16] 0.0, 128
        %750 = vxpose.xlu0.b32.cont [14/16] 0.0, 128
        %751 = vxpose.xlu0.b32.cont [15/16] 0.0, 128
        %752 = vxpose.xlu0.b32.end [16/16] 0.0, 128
        %v753 = vpop.trf.xlu0
        %v754 = vpop.trf.xlu0
        %v755 = vpop.trf.xlu0
        %v756 = vpop.trf.xlu0
        %v757 = vpop.trf.xlu0
        %v758 = vpop.trf.xlu0
        %v759 = vpop.trf.xlu0
        %v760 = vpop.trf.xlu0
        %v761 = vpop.trf.xlu0
        %v762 = vpop.trf.xlu0
        %v763 = vpop.trf.xlu0
        %v764 = vpop.trf.xlu0
        %v765 = vpop.trf.xlu0
        %v766 = vpop.trf.xlu0
        %v767 = vpop.trf.xlu0
        %v768 = vpop.trf.xlu0
        %769 = vxpose.xlu0.b32.start [1/16] %v394, 128
        %770 = vxpose.xlu0.b32.cont [2/16] 0.0, 128
        %771 = vxpose.xlu0.b32.cont [3/16] 0.0, 128
        %772 = vxpose.xlu0.b32.cont [4/16] 0.0, 128
        %773 = vxpose.xlu0.b32.cont [5/16] 0.0, 128
        %774 = vxpose.xlu0.b32.cont [6/16] 0.0, 128
        %775 = vxpose.xlu0.b32.cont [7/16] 0.0, 128
        %776 = vxpose.xlu0.b32.cont [8/16] 0.0, 128
        %777 = vxpose.xlu0.b32.cont [9/16] 0.0, 128
        %778 = vxpose.xlu0.b32.cont [10/16] 0.0, 128
        %779 = vxpose.xlu0.b32.cont [11/16] 0.0, 128
        %780 = vxpose.xlu0.b32.cont [12/16] 0.0, 128
        %781 = vxpose.xlu0.b32.cont [13/16] 0.0, 128
        %782 = vxpose.xlu0.b32.cont [14/16] 0.0, 128
        %783 = vxpose.xlu0.b32.cont [15/16] 0.0, 128
        %784 = vxpose.xlu0.b32.end [16/16] 0.0, 128
        %v785 = vpop.trf.xlu0
        %v786 = vpop.trf.xlu0
        %v787 = vpop.trf.xlu0
        %v788 = vpop.trf.xlu0
        %v789 = vpop.trf.xlu0
        %v790 = vpop.trf.xlu0
        %v791 = vpop.trf.xlu0
        %v792 = vpop.trf.xlu0
        %v793 = vpop.trf.xlu0
        %v794 = vpop.trf.xlu0
        %v795 = vpop.trf.xlu0
        %v796 = vpop.trf.xlu0
        %v797 = vpop.trf.xlu0
        %v798 = vpop.trf.xlu0
        %v799 = vpop.trf.xlu0
        %v800 = vpop.trf.xlu0
        %801 = vxpose.xlu0.b32.start [1/16] %v399, 128
        %802 = vxpose.xlu0.b32.cont [2/16] 0.0, 128
        %803 = vxpose.xlu0.b32.cont [3/16] 0.0, 128
        %804 = vxpose.xlu0.b32.cont [4/16] 0.0, 128
        %805 = vxpose.xlu0.b32.cont [5/16] 0.0, 128
        %806 = vxpose.xlu0.b32.cont [6/16] 0.0, 128
        %807 = vxpose.xlu0.b32.cont [7/16] 0.0, 128
        %808 = vxpose.xlu0.b32.cont [8/16] 0.0, 128
        %809 = vxpose.xlu0.b32.cont [9/16] 0.0, 128
        %810 = vxpose.xlu0.b32.cont [10/16] 0.0, 128
        %811 = vxpose.xlu0.b32.cont [11/16] 0.0, 128
        %812 = vxpose.xlu0.b32.cont [12/16] 0.0, 128
        %813 = vxpose.xlu0.b32.cont [13/16] 0.0, 128
        %814 = vxpose.xlu0.b32.cont [14/16] 0.0, 128
        %815 = vxpose.xlu0.b32.cont [15/16] 0.0, 128
        %816 = vxpose.xlu0.b32.end [16/16] 0.0, 128
        %v817 = vpop.trf.xlu0
        %v818 = vpop.trf.xlu0
        %v819 = vpop.trf.xlu0
        %v820 = vpop.trf.xlu0
        %v821 = vpop.trf.xlu0
        %v822 = vpop.trf.xlu0
        %v823 = vpop.trf.xlu0
        %v824 = vpop.trf.xlu0
        %v825 = vpop.trf.xlu0
        %v826 = vpop.trf.xlu0
        %v827 = vpop.trf.xlu0
        %v828 = vpop.trf.xlu0
        %v829 = vpop.trf.xlu0
        %v830 = vpop.trf.xlu0
        %v831 = vpop.trf.xlu0
        %v832 = vpop.trf.xlu0
        %833 = vxpose.xlu0.b32.start [1/16] %v404, 128
        %834 = vxpose.xlu0.b32.cont [2/16] 0.0, 128
        %835 = vxpose.xlu0.b32.cont [3/16] 0.0, 128
        %836 = vxpose.xlu0.b32.cont [4/16] 0.0, 128
        %837 = vxpose.xlu0.b32.cont [5/16] 0.0, 128
        %838 = vxpose.xlu0.b32.cont [6/16] 0.0, 128
        %839 = vxpose.xlu0.b32.cont [7/16] 0.0, 128
        %840 = vxpose.xlu0.b32.cont [8/16] 0.0, 128
        %841 = vxpose.xlu0.b32.cont [9/16] 0.0, 128
        %842 = vxpose.xlu0.b32.cont [10/16] 0.0, 128
        %843 = vxpose.xlu0.b32.cont [11/16] 0.0, 128
        %844 = vxpose.xlu0.b32.cont [12/16] 0.0, 128
        %845 = vxpose.xlu0.b32.cont [13/16] 0.0, 128
        %846 = vxpose.xlu0.b32.cont [14/16] 0.0, 128
        %847 = vxpose.xlu0.b32.cont [15/16] 0.0, 128
        %848 = vxpose.xlu0.b32.end [16/16] 0.0, 128
        %v849 = vpop.trf.xlu0
        %v850 = vpop.trf.xlu0
        %v851 = vpop.trf.xlu0
        %v852 = vpop.trf.xlu0
        %v853 = vpop.trf.xlu0
        %v854 = vpop.trf.xlu0
        %v855 = vpop.trf.xlu0
        %v856 = vpop.trf.xlu0
        %v857 = vpop.trf.xlu0
        %v858 = vpop.trf.xlu0
        %v859 = vpop.trf.xlu0
        %v860 = vpop.trf.xlu0
        %v861 = vpop.trf.xlu0
        %v862 = vpop.trf.xlu0
        %v863 = vpop.trf.xlu0
        %v864 = vpop.trf.xlu0
        %865 = vxpose.xlu0.b32.start [1/16] %v409, 128
        %866 = vxpose.xlu0.b32.cont [2/16] 0.0, 128
        %867 = vxpose.xlu0.b32.cont [3/16] 0.0, 128
        %868 = vxpose.xlu0.b32.cont [4/16] 0.0, 128
        %869 = vxpose.xlu0.b32.cont [5/16] 0.0, 128
        %870 = vxpose.xlu0.b32.cont [6/16] 0.0, 128
        %871 = vxpose.xlu0.b32.cont [7/16] 0.0, 128
        %872 = vxpose.xlu0.b32.cont [8/16] 0.0, 128
        %873 = vxpose.xlu0.b32.cont [9/16] 0.0, 128
        %874 = vxpose.xlu0.b32.cont [10/16] 0.0, 128
        %875 = vxpose.xlu0.b32.cont [11/16] 0.0, 128
        %876 = vxpose.xlu0.b32.cont [12/16] 0.0, 128
        %877 = vxpose.xlu0.b32.cont [13/16] 0.0, 128
        %878 = vxpose.xlu0.b32.cont [14/16] 0.0, 128
        %879 = vxpose.xlu0.b32.cont [15/16] 0.0, 128
        %880 = vxpose.xlu0.b32.end [16/16] 0.0, 128
        %v881 = vpop.trf.xlu0
        %v882 = vpop.trf.xlu0
        %v883 = vpop.trf.xlu0
        %v884 = vpop.trf.xlu0
        %v885 = vpop.trf.xlu0
        %v886 = vpop.trf.xlu0
        %v887 = vpop.trf.xlu0
        %v888 = vpop.trf.xlu0
        %v889 = vpop.trf.xlu0
        %v890 = vpop.trf.xlu0
        %v891 = vpop.trf.xlu0
        %v892 = vpop.trf.xlu0
        %v893 = vpop.trf.xlu0
        %v894 = vpop.trf.xlu0
        %v895 = vpop.trf.xlu0
        %v896 = vpop.trf.xlu0
        %897 = vxpose.xlu0.b32.start [1/16] %v414, 128
        %898 = vxpose.xlu0.b32.cont [2/16] 0.0, 128
        %899 = vxpose.xlu0.b32.cont [3/16] 0.0, 128
        %900 = vxpose.xlu0.b32.cont [4/16] 0.0, 128
        %901 = vxpose.xlu0.b32.cont [5/16] 0.0, 128
        %902 = vxpose.xlu0.b32.cont [6/16] 0.0, 128
        %903 = vxpose.xlu0.b32.cont [7/16] 0.0, 128
        %904 = vxpose.xlu0.b32.cont [8/16] 0.0, 128
        %905 = vxpose.xlu0.b32.cont [9/16] 0.0, 128
        %906 = vxpose.xlu0.b32.cont [10/16] 0.0, 128
        %907 = vxpose.xlu0.b32.cont [11/16] 0.0, 128
        %908 = vxpose.xlu0.b32.cont [12/16] 0.0, 128
        %909 = vxpose.xlu0.b32.cont [13/16] 0.0, 128
        %910 = vxpose.xlu0.b32.cont [14/16] 0.0, 128
        %911 = vxpose.xlu0.b32.cont [15/16] 0.0, 128
        %912 = vxpose.xlu0.b32.end [16/16] 0.0, 128
        %v913 = vpop.trf.xlu0
        %v914 = vpop.trf.xlu0
        %v915 = vpop.trf.xlu0
        %v916 = vpop.trf.xlu0
        %v917 = vpop.trf.xlu0
        %v918 = vpop.trf.xlu0
        %v919 = vpop.trf.xlu0
        %v920 = vpop.trf.xlu0
        %v921 = vpop.trf.xlu0
        %v922 = vpop.trf.xlu0
        %v923 = vpop.trf.xlu0
        %v924 = vpop.trf.xlu0
        %v925 = vpop.trf.xlu0
        %v926 = vpop.trf.xlu0
        %v927 = vpop.trf.xlu0
        %v928 = vpop.trf.xlu0
        %929 = vxpose.xlu0.b32.start [1/16] %v433, 128
        %930 = vxpose.xlu0.b32.cont [2/16] %v465, 128
        %931 = vxpose.xlu0.b32.cont [3/16] %v497, 128
        %932 = vxpose.xlu0.b32.cont [4/16] %v529, 128
        %933 = vxpose.xlu0.b32.cont [5/16] %v561, 128
        %934 = vxpose.xlu0.b32.cont [6/16] %v593, 128
        %935 = vxpose.xlu0.b32.cont [7/16] %v625, 128
        %936 = vxpose.xlu0.b32.cont [8/16] %v657, 128
        %937 = vxpose.xlu0.b32.cont [9/16] 0.0, 128
        %938 = vxpose.xlu0.b32.cont [10/16] 0.0, 128
        %939 = vxpose.xlu0.b32.cont [11/16] 0.0, 128
        %940 = vxpose.xlu0.b32.cont [12/16] 0.0, 128
        %941 = vxpose.xlu0.b32.cont [13/16] 0.0, 128
        %942 = vxpose.xlu0.b32.cont [14/16] 0.0, 128
        %943 = vxpose.xlu0.b32.cont [15/16] 0.0, 128
        %944 = vxpose.xlu0.b32.end [16/16] 0.0, 128
        %v945 = vpop.trf.xlu0
        %v946 = vpop.trf.xlu0
        %v947 = vpop.trf.xlu0
        %v948 = vpop.trf.xlu0
        %v949 = vpop.trf.xlu0
        %v950 = vpop.trf.xlu0
        %v951 = vpop.trf.xlu0
        %v952 = vpop.trf.xlu0
        %v953 = vpop.trf.xlu0
        %v954 = vpop.trf.xlu0
        %v955 = vpop.trf.xlu0
        %v956 = vpop.trf.xlu0
        %v957 = vpop.trf.xlu0
        %v958 = vpop.trf.xlu0
        %v959 = vpop.trf.xlu0
        %v960 = vpop.trf.xlu0
        %v961 = vpack.c.bf16 %v945, %v945
        %v962 = vpack.c.bf16 %v467, %v435
        %v963 = vpack.c.bf16 %v531, %v499
        %v964 = vpack.c.bf16 %v595, %v563
        %v965 = vpack.c.bf16 %v659, %v627
        %vm966 = vcmask 523264
        %v968 = vsel %vm966, %v961, 0
        %970 = vmatprep.subr.bf16.mxu0 0
        %971 = vmatpush1.bf16.msra.mxu0 %v962
        %972 = vmatprep.subr.bf16.mxu0 0
        %973 = vmatpush1.bf16.msra.mxu0 %v963
        %974 = vmatprep.subr.bf16.mxu0 0
        %975 = vmatpush1.bf16.msra.mxu0 %v964
        %976 = vmatprep.subr.bf16.mxu0 0
        %977 = vmatpush1.bf16.msra.mxu0 %v965
        %978 = vmatprep.subr.bf16.mxu0 0
        %979 = vmatpush1.bf16.msra.mxu0 0
        %980 = vmatprep.subr.bf16.mxu0 0
        %981 = vmatpush1.bf16.msra.mxu0 0
        %982 = vmatprep.subr.bf16.mxu0 0
        %983 = vmatpush1.bf16.msra.mxu0 0
        %984 = vmatprep.subr.bf16.mxu0 0
        %985 = vmatpush1.bf16.msra.mxu0 0
        %986 = vmatprep.subr.bf16.mxu0 0
        %987 = vmatpush1.bf16.msra.mxu0 0
        %988 = vmatprep.subr.bf16.mxu0 0
        %989 = vmatpush1.bf16.msra.mxu0 0
        %990 = vmatprep.subr.bf16.mxu0 0
        %991 = vmatpush1.bf16.msra.mxu0 0
        %992 = vmatprep.subr.bf16.mxu0 0
        %993 = vmatpush1.bf16.msra.mxu0 0
        %994 = vmatprep.subr.bf16.mxu0 0
        %995 = vmatpush1.bf16.msra.mxu0 0
        %996 = vmatprep.subr.bf16.mxu0 0
        %997 = vmatpush1.bf16.msra.mxu0 0
        %998 = vmatprep.subr.bf16.mxu0 0
        %999 = vmatpush1.bf16.msra.mxu0 0
        %1000 = vmatprep.subr.bf16.mxu0 0
        %1001 = vmatpush1.bf16.msra.mxu0 0
        %1002 = vmatprep.mubr.bf16.mxu0 0
        %1003 = vmatmul.mubr.bf16.gmra.mrb[0].mxu0 %v968
        %v1004 = vpop.f32.mrb[0].mxu0
        %v1005 = vadd.f32 0.0, %v1004
        %v1006 = vpop.f32.mrb[0].mxu0
        %v1007 = vpop.f32.mrb[0].mxu0
        %v1008 = vpop.f32.mrb[0].mxu0
        %1009 = vdwg.mxu0
        %1010 = vxpose.xlu0.b32.start [1/16] %v434, 128
        %1011 = vxpose.xlu0.b32.cont [2/16] %v466, 128
        %1012 = vxpose.xlu0.b32.cont [3/16] %v498, 128
        %1013 = vxpose.xlu0.b32.cont [4/16] %v530, 128
        %1014 = vxpose.xlu0.b32.cont [5/16] %v562, 128
        %1015 = vxpose.xlu0.b32.cont [6/16] %v594, 128
        %1016 = vxpose.xlu0.b32.cont [7/16] %v626, 128
        %1017 = vxpose.xlu0.b32.cont [8/16] %v658, 128
        %1018 = vxpose.xlu0.b32.cont [9/16] 0.0, 128
        %1019 = vxpose.xlu0.b32.cont [10/16] 0.0, 128
        %1020 = vxpose.xlu0.b32.cont [11/16] 0.0, 128
        %1021 = vxpose.xlu0.b32.cont [12/16] 0.0, 128
        %1022 = vxpose.xlu0.b32.cont [13/16] 0.0, 128
        %1023 = vxpose.xlu0.b32.cont [14/16] 0.0, 128
        %1024 = vxpose.xlu0.b32.cont [15/16] 0.0, 128
        %1025 = vxpose.xlu0.b32.end [16/16] 0.0, 128
        %v1026 = vpop.trf.xlu0
        %v1027 = vpop.trf.xlu0
        %v1028 = vpop.trf.xlu0
        %v1029 = vpop.trf.xlu0
        %v1030 = vpop.trf.xlu0
        %v1031 = vpop.trf.xlu0
        %v1032 = vpop.trf.xlu0
        %v1033 = vpop.trf.xlu0
        %v1034 = vpop.trf.xlu0
        %v1035 = vpop.trf.xlu0
        %v1036 = vpop.trf.xlu0
        %v1037 = vpop.trf.xlu0
        %v1038 = vpop.trf.xlu0
        %v1039 = vpop.trf.xlu0
        %v1040 = vpop.trf.xlu0
        %v1041 = vpop.trf.xlu0
        %v1042 = vpack.c.bf16 %v1026, %v1026
        %v1043 = vpack.c.bf16 %v468, %v436
        %v1044 = vpack.c.bf16 %v532, %v500
        %v1045 = vpack.c.bf16 %v596, %v564
        %v1046 = vpack.c.bf16 %v660, %v628
        %v1048 = vsel %vm966, %v1042, 0
        %1050 = vmatprep.subr.bf16.mxu0 0
        %1051 = vmatpush1.bf16.msra.mxu0 %v1043
        %1052 = vmatprep.subr.bf16.mxu0 0
        %1053 = vmatpush1.bf16.msra.mxu0 %v1044
        %1054 = vmatprep.subr.bf16.mxu0 0
        %1055 = vmatpush1.bf16.msra.mxu0 %v1045
        %1056 = vmatprep.subr.bf16.mxu0 0
        %1057 = vmatpush1.bf16.msra.mxu0 %v1046
        %1058 = vmatprep.subr.bf16.mxu0 0
        %1059 = vmatpush1.bf16.msra.mxu0 0
        %1060 = vmatprep.subr.bf16.mxu0 0
        %1061 = vmatpush1.bf16.msra.mxu0 0
        %1062 = vmatprep.subr.bf16.mxu0 0
        %1063 = vmatpush1.bf16.msra.mxu0 0
        %1064 = vmatprep.subr.bf16.mxu0 0
        %1065 = vmatpush1.bf16.msra.mxu0 0
        %1066 = vmatprep.subr.bf16.mxu0 0
        %1067 = vmatpush1.bf16.msra.mxu0 0
        %1068 = vmatprep.subr.bf16.mxu0 0
        %1069 = vmatpush1.bf16.msra.mxu0 0
        %1070 = vmatprep.subr.bf16.mxu0 0
        %1071 = vmatpush1.bf16.msra.mxu0 0
        %1072 = vmatprep.subr.bf16.mxu0 0
        %1073 = vmatpush1.bf16.msra.mxu0 0
        %1074 = vmatprep.subr.bf16.mxu0 0
        %1075 = vmatpush1.bf16.msra.mxu0 0
        %1076 = vmatprep.subr.bf16.mxu0 0
        %1077 = vmatpush1.bf16.msra.mxu0 0
        %1078 = vmatprep.subr.bf16.mxu0 0
        %1079 = vmatpush1.bf16.msra.mxu0 0
        %1080 = vmatprep.subr.bf16.mxu0 0
        %1081 = vmatpush1.bf16.msra.mxu0 0
        %1082 = vmatprep.mubr.bf16.mxu0 0
        %1083 = vmatmul.mubr.bf16.gmra.mrb[0].mxu0 %v1048
        %v1084 = vpop.f32.mrb[0].mxu0
        %v1085 = vadd.f32 0.0, %v1084
        %v1086 = vpop.f32.mrb[0].mxu0
        %v1087 = vpop.f32.mrb[0].mxu0
        %v1088 = vpop.f32.mrb[0].mxu0
        %1089 = vdwg.mxu0
        %1090 = vxpose.xlu0.b32.start [1/16] %v689, 128
        %1091 = vxpose.xlu0.b32.cont [2/16] %v721, 128
        %1092 = vxpose.xlu0.b32.cont [3/16] %v753, 128
        %1093 = vxpose.xlu0.b32.cont [4/16] %v785, 128
        %1094 = vxpose.xlu0.b32.cont [5/16] %v817, 128
        %1095 = vxpose.xlu0.b32.cont [6/16] %v849, 128
        %1096 = vxpose.xlu0.b32.cont [7/16] %v881, 128
        %1097 = vxpose.xlu0.b32.cont [8/16] %v913, 128
        %1098 = vxpose.xlu0.b32.cont [9/16] 0.0, 128
        %1099 = vxpose.xlu0.b32.cont [10/16] 0.0, 128
        %1100 = vxpose.xlu0.b32.cont [11/16] 0.0, 128
        %1101 = vxpose.xlu0.b32.cont [12/16] 0.0, 128
        %1102 = vxpose.xlu0.b32.cont [13/16] 0.0, 128
        %1103 = vxpose.xlu0.b32.cont [14/16] 0.0, 128
        %1104 = vxpose.xlu0.b32.cont [15/16] 0.0, 128
        %1105 = vxpose.xlu0.b32.end [16/16] 0.0, 128
        %v1106 = vpop.trf.xlu0
        %v1107 = vpop.trf.xlu0
        %v1108 = vpop.trf.xlu0
        %v1109 = vpop.trf.xlu0
        %v1110 = vpop.trf.xlu0
        %v1111 = vpop.trf.xlu0
        %v1112 = vpop.trf.xlu0
        %v1113 = vpop.trf.xlu0
        %v1114 = vpop.trf.xlu0
        %v1115 = vpop.trf.xlu0
        %v1116 = vpop.trf.xlu0
        %v1117 = vpop.trf.xlu0
        %v1118 = vpop.trf.xlu0
        %v1119 = vpop.trf.xlu0
        %v1120 = vpop.trf.xlu0
        %v1121 = vpop.trf.xlu0
        %v1122 = vpack.c.bf16 %v1106, %v1106
        %v1123 = vpack.c.bf16 %v723, %v691
        %v1124 = vpack.c.bf16 %v787, %v755
        %v1125 = vpack.c.bf16 %v851, %v819
        %v1126 = vpack.c.bf16 %v915, %v883
        %v1128 = vsel %vm966, %v1122, 0
        %1130 = vmatprep.subr.bf16.mxu0 0
        %1131 = vmatpush1.bf16.msra.mxu0 %v1123
        %1132 = vmatprep.subr.bf16.mxu0 0
        %1133 = vmatpush1.bf16.msra.mxu0 %v1124
        %1134 = vmatprep.subr.bf16.mxu0 0
        %1135 = vmatpush1.bf16.msra.mxu0 %v1125
        %1136 = vmatprep.subr.bf16.mxu0 0
        %1137 = vmatpush1.bf16.msra.mxu0 %v1126
        %1138 = vmatprep.subr.bf16.mxu0 0
        %1139 = vmatpush1.bf16.msra.mxu0 0
        %1140 = vmatprep.subr.bf16.mxu0 0
        %1141 = vmatpush1.bf16.msra.mxu0 0
        %1142 = vmatprep.subr.bf16.mxu0 0
        %1143 = vmatpush1.bf16.msra.mxu0 0
        %1144 = vmatprep.subr.bf16.mxu0 0
        %1145 = vmatpush1.bf16.msra.mxu0 0
        %1146 = vmatprep.subr.bf16.mxu0 0
        %1147 = vmatpush1.bf16.msra.mxu0 0
        %1148 = vmatprep.subr.bf16.mxu0 0
        %1149 = vmatpush1.bf16.msra.mxu0 0
        %1150 = vmatprep.subr.bf16.mxu0 0
        %1151 = vmatpush1.bf16.msra.mxu0 0
        %1152 = vmatprep.subr.bf16.mxu0 0
        %1153 = vmatpush1.bf16.msra.mxu0 0
        %1154 = vmatprep.subr.bf16.mxu0 0
        %1155 = vmatpush1.bf16.msra.mxu0 0
        %1156 = vmatprep.subr.bf16.mxu0 0
        %1157 = vmatpush1.bf16.msra.mxu0 0
        %1158 = vmatprep.subr.bf16.mxu0 0
        %1159 = vmatpush1.bf16.msra.mxu0 0
        %1160 = vmatprep.subr.bf16.mxu0 0
        %1161 = vmatpush1.bf16.msra.mxu0 0
        %1162 = vmatprep.mubr.bf16.mxu0 0
        %1163 = vmatmul.mubr.bf16.gmra.mrb[0].mxu0 %v1128
        %v1164 = vpop.f32.mrb[0].mxu0
        %v1165 = vadd.f32 0.0, %v1164
        %v1166 = vpop.f32.mrb[0].mxu0
        %v1167 = vpop.f32.mrb[0].mxu0
        %v1168 = vpop.f32.mrb[0].mxu0
        %1169 = vdwg.mxu0
        %1170 = vxpose.xlu0.b32.start [1/16] %v690, 128
        %1171 = vxpose.xlu0.b32.cont [2/16] %v722, 128
        %1172 = vxpose.xlu0.b32.cont [3/16] %v754, 128
        %1173 = vxpose.xlu0.b32.cont [4/16] %v786, 128
        %1174 = vxpose.xlu0.b32.cont [5/16] %v818, 128
        %1175 = vxpose.xlu0.b32.cont [6/16] %v850, 128
        %1176 = vxpose.xlu0.b32.cont [7/16] %v882, 128
        %1177 = vxpose.xlu0.b32.cont [8/16] %v914, 128
        %1178 = vxpose.xlu0.b32.cont [9/16] 0.0, 128
        %1179 = vxpose.xlu0.b32.cont [10/16] 0.0, 128
        %1180 = vxpose.xlu0.b32.cont [11/16] 0.0, 128
        %1181 = vxpose.xlu0.b32.cont [12/16] 0.0, 128
        %1182 = vxpose.xlu0.b32.cont [13/16] 0.0, 128
        %1183 = vxpose.xlu0.b32.cont [14/16] 0.0, 128
        %1184 = vxpose.xlu0.b32.cont [15/16] 0.0, 128
        %1185 = vxpose.xlu0.b32.end [16/16] 0.0, 128
        %v1186 = vpop.trf.xlu0
        %v1187 = vpop.trf.xlu0
        %v1188 = vpop.trf.xlu0
        %v1189 = vpop.trf.xlu0
        %v1190 = vpop.trf.xlu0
        %v1191 = vpop.trf.xlu0
        %v1192 = vpop.trf.xlu0
        %v1193 = vpop.trf.xlu0
        %v1194 = vpop.trf.xlu0
        %v1195 = vpop.trf.xlu0
        %v1196 = vpop.trf.xlu0
        %v1197 = vpop.trf.xlu0
        %v1198 = vpop.trf.xlu0
        %v1199 = vpop.trf.xlu0
        %v1200 = vpop.trf.xlu0
        %v1201 = vpop.trf.xlu0
        %v1202 = vpack.c.bf16 %v1186, %v1186
        %v1203 = vpack.c.bf16 %v724, %v692
        %v1204 = vpack.c.bf16 %v788, %v756
        %v1205 = vpack.c.bf16 %v852, %v820
        %v1206 = vpack.c.bf16 %v916, %v884
        %v1208 = vsel %vm966, %v1202, 0
        %1210 = vmatprep.subr.bf16.mxu0 0
        %1211 = vmatpush1.bf16.msra.mxu0 %v1203
        %1212 = vmatprep.subr.bf16.mxu0 0
        %1213 = vmatpush1.bf16.msra.mxu0 %v1204
        %1214 = vmatprep.subr.bf16.mxu0 0
        %1215 = vmatpush1.bf16.msra.mxu0 %v1205
        %1216 = vmatprep.subr.bf16.mxu0 0
        %1217 = vmatpush1.bf16.msra.mxu0 %v1206
        %1218 = vmatprep.subr.bf16.mxu0 0
        %1219 = vmatpush1.bf16.msra.mxu0 0
        %1220 = vmatprep.subr.bf16.mxu0 0
        %1221 = vmatpush1.bf16.msra.mxu0 0
        %1222 = vmatprep.subr.bf16.mxu0 0
        %1223 = vmatpush1.bf16.msra.mxu0 0
        %1224 = vmatprep.subr.bf16.mxu0 0
        %1225 = vmatpush1.bf16.msra.mxu0 0
        %1226 = vmatprep.subr.bf16.mxu0 0
        %1227 = vmatpush1.bf16.msra.mxu0 0
        %1228 = vmatprep.subr.bf16.mxu0 0
        %1229 = vmatpush1.bf16.msra.mxu0 0
        %1230 = vmatprep.subr.bf16.mxu0 0
        %1231 = vmatpush1.bf16.msra.mxu0 0
        %1232 = vmatprep.subr.bf16.mxu0 0
        %1233 = vmatpush1.bf16.msra.mxu0 0
        %1234 = vmatprep.subr.bf16.mxu0 0
        %1235 = vmatpush1.bf16.msra.mxu0 0
        %1236 = vmatprep.subr.bf16.mxu0 0
        %1237 = vmatpush1.bf16.msra.mxu0 0
        %1238 = vmatprep.subr.bf16.mxu0 0
        %1239 = vmatpush1.bf16.msra.mxu0 0
        %1240 = vmatprep.subr.bf16.mxu0 0
        %1241 = vmatpush1.bf16.msra.mxu0 0
        %1242 = vmatprep.mubr.bf16.mxu0 0
        %1243 = vmatmul.mubr.bf16.gmra.mrb[0].mxu0 %v1208
        %v1244 = vpop.f32.mrb[0].mxu0
        %v1245 = vadd.f32 0.0, %v1244
        %v1246 = vpop.f32.mrb[0].mxu0
        %v1247 = vpop.f32.mrb[0].mxu0
        %v1248 = vpop.f32.mrb[0].mxu0
        %1249 = vdwg.mxu0
        %1251 = vrot.lane.b32.xlu0 %v1085, 8
        %v1252 = vpop.permute.xlu0 %1251
        %1255 = vrot.lane.b32.xlu0 %v1165, 16
        %v1256 = vpop.permute.xlu0 %1255
        %1259 = vrot.lane.b32.xlu0 %v1245, 24
        %v1260 = vpop.permute.xlu0 %1259
        %vm1262 = vcmask 64512
        %v1263 = vsel %vm1262, %v1005, %v1252
        %vm1264 = vcmask 130048
        %v1265 = vsel %vm1264, %v1263, %v1256
        %vm1266 = vcmask 195584
        %v1267 = vsel %vm1266, %v1265, %v1260
        %v1268 = vmul.f32 %v1267, 0.03125
        %vm1269 = vcmask 261120
        %v1270 = vsel %vm1269, %v1268, -inf
        %v1271 = vrot.slane %v1270, 4
        %v1272 = vmax.f32 %v1270, %v1271
        %v1273 = vrot.slane %v1272, 2
        %v1274 = vmax.f32 %v1272, %v1273
        %v1275 = vrot.slane %v1274, 1
        %v1276 = vmax.f32 %v1274, %v1275
        %v1277 = vsub.f32 %v1268, %v1276
        %v1278 = vmul.f32 %v1277, 1.442695
        %v1279 = vpow.pop %v1278
        %v1280 = vsel %vm1269, %v1279, 0.0
        %v1281 = vrot.slane %v1280, 4
        %v1282 = vadd.f32 %v1280, %v1281
        %v1283 = vrot.slane %v1282, 2
        %v1284 = vadd.f32 %v1282, %v1283
        %v1285 = vrot.slane %v1284, 1
        %v1286 = vadd.f32 %v1284, %v1285
        %v1287 = vrcp.pop %v1286
        %v1288 = vmul.f32 %v1279, %v1287
        %v1289 = vld [vmem:[%s2] sm:$0xff]
        %v1290 = vadd.f32 %v1289, %v1288
        %v1291 = vld [vmem:[%s3] sm:$0xff]
        %v1292 = vmul.f32 %v1290, %v1291
        %1293 = vst.msk [vmem:[%s193] sm:$0xff] %vm1269, %v1292
        %s1294 = sand.u32 %s115, 1
        %s1295 = scalar_lea.sflag [#allocation3], %s1294
        %s1296 = sand.u32 %s115, 1
        %s1297 = smul.addr %s1296, 8
        %s1298 = scalar_lea.vmem [#allocation2], %s1297
        // Predicated region
        $region37: #{tpu_custom_call.1} parent=35 // pred_check
          %p1299 = pneg %p125
        $region38: #{tpu_custom_call.1} parent=35 // pred_check_branch
          %1301 = sbr.rel (%p1299) target = $region40
        $region39: #{tpu_custom_call.1} parent=35 // pred_region
          %s1303 = ssub.s32 128, 128
          %1304 = vsyncadd %s1295, %s1303
          %s1305 = smul.addr %s18, 128
          %s1306 = scalar_lea.hbm %s4, %s1305
          %s1308 = sshll.u32 %s1298, 4
          %s1309 = int_to_ptr.vmem [resolvable:$true] %s1308
          %1311 = dma.vmem_to_hbm [thread:$0]  %s1309, 128, %s1306, %s1295
        $region40: #{tpu_custom_call.1} parent=35 // pred_fallthru
          _
      $region36: #{tpu_custom_call.1} parent=5 // pred_fallthru
        _
      %p1312 = scmp.le.s32.totalorder 2, %s13
      // Predicated region
      $region41: #{tpu_custom_call.1} parent=5 // pred_check
        %p1313 = pneg %p1312
      $region42: #{tpu_custom_call.1} parent=5 // pred_check_branch
        %1315 = sbr.rel (%p1313) target = $region44
      $region43: #{tpu_custom_call.1} parent=5 // pred_region
        %s1316 = ssub.s32 %s13, 2
        // Predicated region
        $region45: #{tpu_custom_call.1} parent=43 // pred_check
          %p1317 = pneg %p131
        $region46: #{tpu_custom_call.1} parent=43 // pred_check_branch
          %1319 = sbr.rel (%p1317) target = $region48
        $region47: #{tpu_custom_call.1} parent=43 // pred_region
          %s1320 = sand.u32 %s116, 1
          %s1321 = scalar_lea.sflag [#allocation3], %s1320
          %s1322 = sand.u32 %s116, 1
          %s1323 = smul.addr %s1322, 8
          %s1324 = scalar_lea.vmem [#allocation2], %s1323
          %1325 = dma.done %s1321, 128
        $region48: #{tpu_custom_call.1} parent=43 // pred_fallthru
          _
      $region44: #{tpu_custom_call.1} parent=5 // pred_fallthru
        _
    $region6: #{tpu_custom_call.1} parent=1 // loop_footer
      %s17 = sadd.s32 1, %s13
    $region7: #{tpu_custom_call.1} parent=1 // loop_footer_branch
      %12 = sbr.rel target = $region3
    $region8: #{tpu_custom_call.1} parent=1 // loop_exit
      _
    %1326 = vsyncpa [#allocation3], 1
    %s1327 = scalar_lea.sflag [#allocation3], 1
    %1328 = vsyncpa %s1327, 1

</llo_original>
